<compile_context>
chip_gen: v5e
topology: v5e:2x2
jax: 0.10.0
libtpu: 0.0.40
codegen_flags: <defaults>
</compile_context>

<pallas_src>
import math

import jax
import jax.numpy as jnp
from jax import lax
from jax.experimental import pallas as pl
from jax.experimental.pallas import tpu as pltpu

# OGB full_atom_feature_dims (get_atom_feature_dims()):
FULL_ATOM_FEATURE_DIMS = [119, 4, 12, 12, 10, 6, 6, 2, 2]


def _round_up(x, m):
    return (x + m - 1) // m * m


def atom_encoder_kernel(idx_ref, table_ref, out_ref):
    """idx_ref:   (tm, F)  int32  (indices already offset into concat vocab)
    table_ref: (Vp, Ep) float32 (concatenated + padded embedding tables)
    out_ref:   (tm, Ep) float32
    """
    tm, F = idx_ref.shape
    Vp, _ = table_ref.shape

    idx = idx_ref[...]                                        # (tm, F) int32
    iota = lax.broadcasted_iota(jnp.int32, (tm, Vp), 1)       # (tm, Vp)

    # Multi-hot over the concatenated vocabulary.  Per-feature vocab ranges
    # are disjoint (offsets), so OR of the F one-hot masks == their sum.
    # Single bool->f32 cast at the end; no zero-init, no per-feature converts.
    hot = iota == idx[:, 0:1]
    for f in range(1, F):                                     # F small & static
        hot = jnp.logical_or(hot, iota == idx[:, f:f + 1])
    multi_hot = hot.astype(jnp.float32)                       # (tm, Vp) of 0/1

    # Embedding-lookup-and-sum == multi_hot @ table (runs on the MXU).
    out_ref[...] = jnp.dot(multi_hot, table_ref[...],
                           preferred_element_type=jnp.float32)


def atom_encoder(x, table, offsets, emb_dim, *, tm=256):
    """x: [N, F] int32, table: [Vp, Ep] f32, offsets: [F] int32 -> [N, emb_dim] f32."""
    N, F = x.shape
    Vp, Ep = table.shape

    # Offset each feature column into the concatenated vocab (plain-JAX glue).
    x_off = (x + offsets[None, :]).astype(jnp.int32)

    # Pad atom count to a multiple of the tile size.
    Np = _round_up(N, tm)
    if Np != N:
        x_off = jnp.pad(x_off, ((0, Np - N), (0, 0)))

    grid = (Np // tm,)
    cost = pl.CostEstimate(
        flops=2 * Np * Vp * Ep,
        transcendentals=0,
        bytes_accessed=Np * F * 4 + Vp * Ep * 4 + Np * Ep * 4,
    )
    out = pl.pallas_call(
        atom_encoder_kernel,
        out_shape=jax.ShapeDtypeStruct((Np, Ep), jnp.float32),
        grid_spec=pltpu.PrefetchScalarGridSpec(
            num_scalar_prefetch=0,
            grid=grid,
            in_specs=[
                pl.BlockSpec((tm, F), lambda i: (i, 0)),   # per-tile indices
                pl.BlockSpec((Vp, Ep), lambda i: (0, 0)),  # full table, resident
            ],
            out_specs=pl.BlockSpec((tm, Ep), lambda i: (i, 0)),
        ),
        compiler_params=pltpu.CompilerParams(
            dimension_semantics=("parallel",)),
        cost_estimate=cost,
    )(x_off, table)
    return out[:N, :emb_dim]


def build_params(key, emb_dim):
    """Deterministic xavier_uniform init per feature table, concatenated+padded."""
    tables = []
    keys = jax.random.split(key, len(FULL_ATOM_FEATURE_DIMS))
    for k, dim in zip(keys, FULL_ATOM_FEATURE_DIMS):
        bound = math.sqrt(6.0 / (dim + emb_dim))
        tables.append(jax.random.uniform(k, (dim, emb_dim), jnp.float32,
                                         minval=-bound, maxval=bound))
    table = jnp.concatenate(tables, axis=0)                   # [V, E]
    V, E = table.shape
    Vp = _round_up(V, 256)                                    # clean MXU K passes
    Ep = _round_up(E, 128)                                    # lane-dense output
    table = jnp.pad(table, ((0, Vp - V), (0, Ep - E)))        # zero pad rows/cols
    offsets = jnp.array(
        [0] + list(jnp.cumsum(jnp.array(FULL_ATOM_FEATURE_DIMS[:-1])).tolist()),
        dtype=jnp.int32)                                      # [F]
    return table, offsets


def reference(x, table, offsets, emb_dim):
    # Pure-JAX reference of the PyTorch forward: sum of F embedding lookups.
    idx = x + offsets[None, :]
    return jnp.sum(table[idx], axis=1)[:, :emb_dim]


if __name__ == "__main__":
    key = jax.random.PRNGKey(0)
    k_tab, k_idx = jax.random.split(key)

    emb_dim = 32
    N = 300                                                   # atoms (non-multiple of tm on purpose)
    F = len(FULL_ATOM_FEATURE_DIMS)

    table, offsets = build_params(k_tab, emb_dim)

    # Deterministic synthetic atom features: x[:, f] in [0, dims[f]).
    cols = []
    for f, dim in enumerate(FULL_ATOM_FEATURE_DIMS):
        kf = jax.random.fold_in(k_idx, f)
        cols.append(jax.random.randint(kf, (N,), 0, dim, dtype=jnp.int32))
    x = jnp.stack(cols, axis=1)                               # [N, F] int32

    out = atom_encoder(x, table, offsets, emb_dim, tm=256)
    out = jax.block_until_ready(out)

    ref = reference(x, table, offsets, emb_dim)
    assert out.shape == (N, emb_dim)
    assert jnp.allclose(out, ref, atol=1e-5, rtol=1e-5), "mismatch vs reference"
    print("KERNEL_OK")
</pallas_src>

<mosaic_0001>
module attributes {stable_mosaic.version = 11 : i64} {
  func.func @atom_encoder_kernel(%arg0: i32, %arg1: memref<256x9xi32, #tpu.memory_space<vmem>>, %arg2: memref<256x128xf32, #tpu.memory_space<vmem>>, %arg3: memref<256x128xf32, #tpu.memory_space<vmem>>) attributes {dimension_semantics = [#tpu.dimension_semantics<parallel>], iteration_bounds = array<i64: 2>, scalar_prefetch = 0 : i64, scratch_operands = 0 : i64, tpu.core_type = #tpu.core_type<tc>, window_params = [{transform_indices = @transform_0, window_bounds = array<i64: 256, 9>}, {pipeline_mode = #tpu.pipeline_mode<synchronous>, transform_indices = @transform_1, window_bounds = array<i64: 256, 128>}, {transform_indices = @transform_2, window_bounds = array<i64: 256, 128>}]} {
    %c0 = arith.constant 0 : index
    %c0_0 = arith.constant 0 : index
    %0 = vector.load %arg1[%c0, %c0_0] : memref<256x9xi32, #tpu.memory_space<vmem>>, vector<256x9xi32>
    %1 = tpu.iota {dimensions = array<i32: 1>} : vector<256x256xi32>
    %2 = vector.extract_strided_slice %0 {offsets = [0, 0], sizes = [256, 1], strides = [1, 1]} : vector<256x9xi32> to vector<256x1xi32>
    %3 = vector.broadcast %2 : vector<256x1xi32> to vector<256x256xi32>
    %4 = arith.cmpi eq, %1, %3 : vector<256x256xi32>
    %5 = vector.extract_strided_slice %0 {offsets = [0, 1], sizes = [256, 1], strides = [1, 1]} : vector<256x9xi32> to vector<256x1xi32>
    %6 = vector.broadcast %5 : vector<256x1xi32> to vector<256x256xi32>
    %7 = arith.cmpi eq, %1, %6 : vector<256x256xi32>
    %8 = arith.ori %4, %7 : vector<256x256xi1>
    %9 = vector.extract_strided_slice %0 {offsets = [0, 2], sizes = [256, 1], strides = [1, 1]} : vector<256x9xi32> to vector<256x1xi32>
    %10 = vector.broadcast %9 : vector<256x1xi32> to vector<256x256xi32>
    %11 = arith.cmpi eq, %1, %10 : vector<256x256xi32>
    %12 = arith.ori %8, %11 : vector<256x256xi1>
    %13 = vector.extract_strided_slice %0 {offsets = [0, 3], sizes = [256, 1], strides = [1, 1]} : vector<256x9xi32> to vector<256x1xi32>
    %14 = vector.broadcast %13 : vector<256x1xi32> to vector<256x256xi32>
    %15 = arith.cmpi eq, %1, %14 : vector<256x256xi32>
    %16 = arith.ori %12, %15 : vector<256x256xi1>
    %17 = vector.extract_strided_slice %0 {offsets = [0, 4], sizes = [256, 1], strides = [1, 1]} : vector<256x9xi32> to vector<256x1xi32>
    %18 = vector.broadcast %17 : vector<256x1xi32> to vector<256x256xi32>
    %19 = arith.cmpi eq, %1, %18 : vector<256x256xi32>
    %20 = arith.ori %16, %19 : vector<256x256xi1>
    %21 = vector.extract_strided_slice %0 {offsets = [0, 5], sizes = [256, 1], strides = [1, 1]} : vector<256x9xi32> to vector<256x1xi32>
    %22 = vector.broadcast %21 : vector<256x1xi32> to vector<256x256xi32>
    %23 = arith.cmpi eq, %1, %22 : vector<256x256xi32>
    %24 = arith.ori %20, %23 : vector<256x256xi1>
    %25 = vector.extract_strided_slice %0 {offsets = [0, 6], sizes = [256, 1], strides = [1, 1]} : vector<256x9xi32> to vector<256x1xi32>
    %26 = vector.broadcast %25 : vector<256x1xi32> to vector<256x256xi32>
    %27 = arith.cmpi eq, %1, %26 : vector<256x256xi32>
    %28 = arith.ori %24, %27 : vector<256x256xi1>
    %29 = vector.extract_strided_slice %0 {offsets = [0, 7], sizes = [256, 1], strides = [1, 1]} : vector<256x9xi32> to vector<256x1xi32>
    %30 = vector.broadcast %29 : vector<256x1xi32> to vector<256x256xi32>
    %31 = arith.cmpi eq, %1, %30 : vector<256x256xi32>
    %32 = arith.ori %28, %31 : vector<256x256xi1>
    %33 = vector.extract_strided_slice %0 {offsets = [0, 8], sizes = [256, 1], strides = [1, 1]} : vector<256x9xi32> to vector<256x1xi32>
    %34 = vector.broadcast %33 : vector<256x1xi32> to vector<256x256xi32>
    %35 = arith.cmpi eq, %1, %34 : vector<256x256xi32>
    %36 = arith.ori %32, %35 : vector<256x256xi1>
    %37 = arith.extui %36 : vector<256x256xi1> to vector<256x256xi32>
    %38 = arith.sitofp %37 : vector<256x256xi32> to vector<256x256xf32>
    %c0_1 = arith.constant 0 : index
    %c0_2 = arith.constant 0 : index
    %39 = vector.load %arg2[%c0_1, %c0_2] : memref<256x128xf32, #tpu.memory_space<vmem>>, vector<256x128xf32>
    %cst = arith.constant dense<0.000000e+00> : vector<256x128xf32>
    %40 = tpu.matmul %38, %39, %cst {dimension_numbers = #tpu.dot_dimension_numbers<[1], [0], [0], [1], [0, 0, 1, 1], [], []>} : vector<256x256xf32>, vector<256x128xf32>, vector<256x128xf32> -> vector<256x128xf32>
    %c0_3 = arith.constant 0 : index
    %c0_4 = arith.constant 0 : index
    %41 = vector.load %arg3[%c0_3, %c0_4] : memref<256x128xf32, #tpu.memory_space<vmem>>, vector<256x128xf32>
    tpu.vector_store %arg3[%c0_3, %c0_4], %40 {strides = array<i32>} : memref<256x128xf32, #tpu.memory_space<vmem>>, vector<256x128xf32>,
    return
  }
  func.func @transform_0(%arg0: i32) -> (i32, i32) {
    %c0_i32 = arith.constant 0 : i32
    %c0_i32_0 = arith.constant 0 : i32
    return %arg0, %c0_i32 : i32, i32
  }
  func.func @transform_1(%arg0: i32) -> (i32, i32) {
    %c0_i32 = arith.constant 0 : i32
    %c0_i32_0 = arith.constant 0 : i32
    %c0_i32_1 = arith.constant 0 : i32
    return %c0_i32, %c0_i32_0 : i32, i32
  }
  func.func @transform_2(%arg0: i32) -> (i32, i32) {
    %c0_i32 = arith.constant 0 : i32
    %c0_i32_0 = arith.constant 0 : i32
    return %arg0, %c0_i32 : i32, i32
  }
}

</mosaic_0001>

<llo_original>
// kernel: tpu_custom_call.1
$region0: #{tpu_custom_call.1}
  #allocation0 [shape = 'u32[]', space=smem, size = 0x4, offset = 0x4, fixed_abs, tag = 'smem constant byte address 0x4 - core index']
  #allocation1 [shape = 'u32[72,128]{1,0:T(1,128)}', space=vmem, size = 0x9000, scoped, tag = 'internal scratch']
  %s0 = inlined_call_operand.vmem [shape: s32[512,9], index: 0, kind: input, shape index: {}]
  %s1 = inlined_call_operand.vmem [shape: f32[256,128], index: 1, kind: input, shape index: {}]
  %s2 = inlined_call_operand.hbm [shape: f32[512,128], index: 2, kind: output, shape index: {}]
  %s3 = sld [smem:[#allocation0]]
  $region41: #{tpu_custom_call.1} parent=0
    _
  %s5 = ssub.s32 1, %s3
  %s6 = scalar_select 0, %s5, %s3
  $region1: #{tpu_custom_call.1} parent=0
    #allocation2 [shape = 'u8[262144]{0}', space=vmem, size = 0x40000, scoped, tag = 'output window, operand 0']
    #allocation3 [shape = 's32[2]{0}', space=sflag, size = 0x8, scoped, tag = 'scoped memory for tpu_custom_call.1']
    %7 = vsyncpa [#allocation3], 0
    %s8 = scalar_lea.sflag [#allocation3], 1
    %9 = vsyncpa %s8, 0
    loop: start=0, step=1, limit=4
    $region2: #{tpu_custom_call.1} parent=1 // loop_pre_header
      _
    $region3: #{tpu_custom_call.1} parent=1 // loop_header
      %s11 = sphi 0, %s15
      %p12 = scmp.ge.s32.totalorder %s11, 4
      %s21 = sphi 0, %s23
      %s24 = sphi 0, %s21
      %s25 = sphi 0, %s24
      %s41 = sphi 0, %s25
      %s45 = sphi 0, %s45
      %s47 = sphi 0, %s45
      %s48 = sphi 0, %s47
      %s62 = sphi 0, %s48
      %s68 = sphi 0, %s70
      %s71 = sphi 0, %s68
      %s72 = sphi 0, %s71
      %s88 = sphi 0, %s72
    $region4: #{tpu_custom_call.1} parent=1 // loop_header_branch
      %14 = sbr.rel (%p12) target = $region8
    $region5: #{tpu_custom_call.1} parent=1 // loop_body
      %s16 = ssub.s32 %s11, 1
      %s17 = ssub.s32 %s11, 2
      %s18 = sadd.s32 %s11, 1
      %s19 = ssub.s32 %s11, %s18
      %p20 = scmp.eq.s32.totalorder %s19, 0
      %s22 = sadd.s32 %s21, 1
      %s23 = scalar_select %p20, %s21, %s22
      %p26 = pneg %p20
      %p27 = scmp.eq.s32.totalorder %s11, 1
      %p28 = por %p26, %p27
      %p29 = scmp.ne.s32.totalorder %s21, %s24
      %p30 = scmp.eq.s32.totalorder %s11, 0
      %p31 = por %p29, %p30
      %p32 = scmp.ne.s32.totalorder %s21, %s24
      %p33 = scmp.eq.s32.totalorder %s16, 1
      %p34 = por %p32, %p33
      %p35 = scmp.ne.s32.totalorder %s24, %s25
      %p36 = scmp.eq.s32.totalorder %s16, 0
      %p37 = por %p35, %p36
      %p38 = scmp.ne.s32.totalorder %s24, %s25
      %p39 = scmp.eq.s32.totalorder %s17, 1
      %p40 = por %p38, %p39
      %p42 = scmp.ne.s32.totalorder %s25, %s41
      %p43 = scmp.eq.s32.totalorder %s17, 0
      %p44 = por %p42, %p43
      %s46 = sadd.s32 %s45, 1
      %p49 = scmp.eq.s32.totalorder %s11, 1
      %p50 = scmp.ne.s32.totalorder %s45, %s47
      %p51 = scmp.eq.s32.totalorder %s11, 0
      %p52 = por %p50, %p51
      %p53 = scmp.ne.s32.totalorder %s45, %s47
      %p54 = scmp.eq.s32.totalorder %s16, 1
      %p55 = por %p53, %p54
      %p56 = scmp.ne.s32.totalorder %s47, %s48
      %p57 = scmp.eq.s32.totalorder %s16, 0
      %p58 = por %p56, %p57
      %p59 = scmp.ne.s32.totalorder %s47, %s48
      %p60 = scmp.eq.s32.totalorder %s17, 1
      %p61 = por %p59, %p60
      %p63 = scmp.ne.s32.totalorder %s48, %s62
      %p64 = scmp.eq.s32.totalorder %s17, 0
      %p65 = por %p63, %p64
      %s66 = ssub.s32 %s11, %s18
      %p67 = scmp.eq.s32.totalorder %s66, 0
      %s69 = sadd.s32 %s68, 1
      %s70 = scalar_select %p67, %s68, %s69
      %p73 = pneg %p67
      %p74 = scmp.eq.s32.totalorder %s11, 1
      %p75 = por %p73, %p74
      %p76 = scmp.ne.s32.totalorder %s68, %s71
      %p77 = scmp.eq.s32.totalorder %s11, 0
      %p78 = por %p76, %p77
      %p79 = scmp.ne.s32.totalorder %s68, %s71
      %p80 = scmp.eq.s32.totalorder %s16, 1
      %p81 = por %p79, %p80
      %p82 = scmp.ne.s32.totalorder %s71, %s72
      %p83 = scmp.eq.s32.totalorder %s16, 0
      %p84 = por %p82, %p83
      %p85 = scmp.ne.s32.totalorder %s71, %s72
      %p86 = scmp.eq.s32.totalorder %s17, 1
      %p87 = por %p85, %p86
      %p89 = scmp.ne.s32.totalorder %s72, %s88
      %p90 = scmp.eq.s32.totalorder %s17, 0
      %p91 = por %p89, %p90
      %p92 = scmp.le.s32.totalorder 1, %s11
      %p93 = scmp.lt.s32.totalorder %s11, 3
      %p94 = pnand %p92, %p93
      %p95 = pneg %p94
      // Predicated region
      $region9: #{tpu_custom_call.1} parent=5 // pred_check
        _
      $region10: #{tpu_custom_call.1} parent=5 // pred_check_branch
        %97 = sbr.rel (%p94) target = $region12
      $region11: #{tpu_custom_call.1} parent=5 // pred_region
        %s98 = ssub.s32 %s11, 1
        // Predicated region
        $region13: #{tpu_custom_call.1} parent=11 // pred_check
          %p99 = pneg %p58
        $region14: #{tpu_custom_call.1} parent=11 // pred_check_branch
          %101 = sbr.rel (%p99) target = $region16
        $region15: #{tpu_custom_call.1} parent=11 // pred_region
          _
        $region16: #{tpu_custom_call.1} parent=11 // pred_fallthru
          _
      $region12: #{tpu_custom_call.1} parent=5 // pred_fallthru
        _
      %p102 = scmp.lt.s32.totalorder %s11, 2
      // Predicated region
      $region17: #{tpu_custom_call.1} parent=5 // pred_check
        %p103 = pneg %p102
      $region18: #{tpu_custom_call.1} parent=5 // pred_check_branch
        %105 = sbr.rel (%p103) target = $region20
      $region19: #{tpu_custom_call.1} parent=5 // pred_region
        // Predicated region
        $region21: #{tpu_custom_call.1} parent=19 // pred_check
          %p106 = pneg %p31
        $region22: #{tpu_custom_call.1} parent=19 // pred_check_branch
          %108 = sbr.rel (%p106) target = $region24
        $region23: #{tpu_custom_call.1} parent=19 // pred_region
          %s109 = smul.u32 32, %s11
          %p110 = scmp.lt.s32.totalorder %s109, 63
          %s111 = scalar_select %p110, %s109, 63
          %s112 = smul.addr %s111, 8
          %s113 = scalar_lea.vmem %s0, %s112
          %s114 = smul.u32 32, %s11
        $region24: #{tpu_custom_call.1} parent=19 // pred_fallthru
          _
      $region20: #{tpu_custom_call.1} parent=5 // pred_fallthru
        _
      %p115 = scmp.le.s32.totalorder 1, %s11
      %p116 = scmp.lt.s32.totalorder %s11, 3
      %p117 = pnand %p115, %p116
      %p118 = pneg %p117
      // Predicated region
      $region25: #{tpu_custom_call.1} parent=5 // pred_check
        _
      $region26: #{tpu_custom_call.1} parent=5 // pred_check_branch
        %120 = sbr.rel (%p117) target = $region28
      $region27: #{tpu_custom_call.1} parent=5 // pred_region
        %s121 = ssub.s32 %s11, 1
        %s122 = smul.u32 32, %s16
        %p123 = scmp.lt.s32.totalorder %s122, 63
        %s124 = scalar_select %p123, %s122, 63
        %s125 = smul.addr %s124, 8
        %s126 = scalar_lea.vmem %s0, %s125
        %p127 = pneg %p37
        %p128 = pneg %p34
        %p129 = pneg %p58
        %p130 = pneg %p55
        %p131 = pneg %p84
        %p132 = pneg %p81
        %s133 = sand.u32 %s71, 1
        %s134 = scalar_lea.sflag [#allocation3], %s133
        %s135 = sand.u32 %s71, 1
        %s136 = smul.addr %s135, 256
        %s137 = scalar_lea.vmem [#allocation2], %s136
        %s138 = smul.u32 32, %s16
        %p139 = scmp.lt.s32.totalorder %s138, 63
        %s140 = scalar_select %p139, %s138, 63
        %s141 = smul.addr %s140, 8
        %s142 = scalar_lea.vmem %s0, %s141
        %s143 = smul.u32 32, %s16
        %s144 = smul.u32 32, %s16
        %v145 = vld [vmem:[%s142] sm:$0xff]
        %v146 = vld [vmem:[%s142 + $0x8] sm:$0xff]
        %v147 = vld [vmem:[%s142 + $0x10] sm:$0xff]
        %v148 = vld [vmem:[%s142 + $0x18] sm:$0xff]
        %v149 = vld [vmem:[%s142 + $0x20] sm:$0xff]
        %v150 = vld [vmem:[%s142 + $0x28] sm:$0xff]
        %v151 = vld [vmem:[%s142 + $0x30] sm:$0xff]
        %v152 = vld [vmem:[%s142 + $0x38] sm:$0xff]
        %v153 = vld [vmem:[%s142 + $0x40] sm:$0xff]
        %v154 = vld [vmem:[%s142 + $0x48] sm:$0xff]
        %v155 = vld [vmem:[%s142 + $0x50] sm:$0xff]
        %v156 = vld [vmem:[%s142 + $0x58] sm:$0xff]
        %v157 = vld [vmem:[%s142 + $0x60] sm:$0xff]
        %v158 = vld [vmem:[%s142 + $0x68] sm:$0xff]
        %v159 = vld [vmem:[%s142 + $0x70] sm:$0xff]
        %v160 = vld [vmem:[%s142 + $0x78] sm:$0xff]
        %v161 = vld [vmem:[%s142 + $0x80] sm:$0xff]
        %v162 = vld [vmem:[%s142 + $0x88] sm:$0xff]
        %v163 = vld [vmem:[%s142 + $0x90] sm:$0xff]
        %v164 = vld [vmem:[%s142 + $0x98] sm:$0xff]
        %v165 = vld [vmem:[%s142 + $0xa0] sm:$0xff]
        %v166 = vld [vmem:[%s142 + $0xa8] sm:$0xff]
        %v167 = vld [vmem:[%s142 + $0xb0] sm:$0xff]
        %v168 = vld [vmem:[%s142 + $0xb8] sm:$0xff]
        %v169 = vld [vmem:[%s142 + $0xc0] sm:$0xff]
        %v170 = vld [vmem:[%s142 + $0xc8] sm:$0xff]
        %v171 = vld [vmem:[%s142 + $0xd0] sm:$0xff]
        %v172 = vld [vmem:[%s142 + $0xd8] sm:$0xff]
        %v173 = vld [vmem:[%s142 + $0xe0] sm:$0xff]
        %v174 = vld [vmem:[%s142 + $0xe8] sm:$0xff]
        %v175 = vld [vmem:[%s142 + $0xf0] sm:$0xff]
        %v176 = vld [vmem:[%s142 + $0xf8] sm:$0xff]
        %v177 = vlaneseq
        %v178 = vand.u32 %v177, 127
        %v179 = vadd.s32 %v178, 128
        %180 = vset.pattern.permute.xlu0 0
        %181 = vperm.xlu0 %180, %v145
        %v182 = vpop.permute.xlu0 %181
        %183 = vset.pattern.permute.xlu0 0
        %184 = vperm.xlu0 %183, %v146
        %v185 = vpop.permute.xlu0 %184
        %186 = vset.pattern.permute.xlu0 0
        %187 = vperm.xlu0 %186, %v147
        %v188 = vpop.permute.xlu0 %187
        %189 = vset.pattern.permute.xlu0 0
        %190 = vperm.xlu0 %189, %v148
        %v191 = vpop.permute.xlu0 %190
        %192 = vset.pattern.permute.xlu0 0
        %193 = vperm.xlu0 %192, %v149
        %v194 = vpop.permute.xlu0 %193
        %195 = vset.pattern.permute.xlu0 0
        %196 = vperm.xlu0 %195, %v150
        %v197 = vpop.permute.xlu0 %196
        %198 = vset.pattern.permute.xlu0 0
        %199 = vperm.xlu0 %198, %v151
        %v200 = vpop.permute.xlu0 %199
        %201 = vset.pattern.permute.xlu0 0
        %202 = vperm.xlu0 %201, %v152
        %v203 = vpop.permute.xlu0 %202
        %204 = vset.pattern.permute.xlu0 0
        %205 = vperm.xlu0 %204, %v153
        %v206 = vpop.permute.xlu0 %205
        %207 = vset.pattern.permute.xlu0 0
        %208 = vperm.xlu0 %207, %v154
        %v209 = vpop.permute.xlu0 %208
        %210 = vset.pattern.permute.xlu0 0
        %211 = vperm.xlu0 %210, %v155
        %v212 = vpop.permute.xlu0 %211
        %213 = vset.pattern.permute.xlu0 0
        %214 = vperm.xlu0 %213, %v156
        %v215 = vpop.permute.xlu0 %214
        %216 = vset.pattern.permute.xlu0 0
        %217 = vperm.xlu0 %216, %v157
        %v218 = vpop.permute.xlu0 %217
        %219 = vset.pattern.permute.xlu0 0
        %220 = vperm.xlu0 %219, %v158
        %v221 = vpop.permute.xlu0 %220
        %222 = vset.pattern.permute.xlu0 0
        %223 = vperm.xlu0 %222, %v159
        %v224 = vpop.permute.xlu0 %223
        %225 = vset.pattern.permute.xlu0 0
        %226 = vperm.xlu0 %225, %v160
        %v227 = vpop.permute.xlu0 %226
        %228 = vset.pattern.permute.xlu0 0
        %229 = vperm.xlu0 %228, %v161
        %v230 = vpop.permute.xlu0 %229
        %231 = vset.pattern.permute.xlu0 0
        %232 = vperm.xlu0 %231, %v162
        %v233 = vpop.permute.xlu0 %232
        %234 = vset.pattern.permute.xlu0 0
        %235 = vperm.xlu0 %234, %v163
        %v236 = vpop.permute.xlu0 %235
        %237 = vset.pattern.permute.xlu0 0
        %238 = vperm.xlu0 %237, %v164
        %v239 = vpop.permute.xlu0 %238
        %240 = vset.pattern.permute.xlu0 0
        %241 = vperm.xlu0 %240, %v165
        %v242 = vpop.permute.xlu0 %241
        %243 = vset.pattern.permute.xlu0 0
        %244 = vperm.xlu0 %243, %v166
        %v245 = vpop.permute.xlu0 %244
        %246 = vset.pattern.permute.xlu0 0
        %247 = vperm.xlu0 %246, %v167
        %v248 = vpop.permute.xlu0 %247
        %249 = vset.pattern.permute.xlu0 0
        %250 = vperm.xlu0 %249, %v168
        %v251 = vpop.permute.xlu0 %250
        %252 = vset.pattern.permute.xlu0 0
        %253 = vperm.xlu0 %252, %v169
        %v254 = vpop.permute.xlu0 %253
        %255 = vset.pattern.permute.xlu0 0
        %256 = vperm.xlu0 %255, %v170
        %v257 = vpop.permute.xlu0 %256
        %258 = vset.pattern.permute.xlu0 0
        %259 = vperm.xlu0 %258, %v171
        %v260 = vpop.permute.xlu0 %259
        %261 = vset.pattern.permute.xlu0 0
        %262 = vperm.xlu0 %261, %v172
        %v263 = vpop.permute.xlu0 %262
        %264 = vset.pattern.permute.xlu0 0
        %265 = vperm.xlu0 %264, %v173
        %v266 = vpop.permute.xlu0 %265
        %267 = vset.pattern.permute.xlu0 0
        %268 = vperm.xlu0 %267, %v174
        %v269 = vpop.permute.xlu0 %268
        %270 = vset.pattern.permute.xlu0 0
        %271 = vperm.xlu0 %270, %v175
        %v272 = vpop.permute.xlu0 %271
        %273 = vset.pattern.permute.xlu0 0
        %274 = vperm.xlu0 %273, %v176
        %v275 = vpop.permute.xlu0 %274
        %vm276 = vcmp.eq.s32.totalorder %v178, %v182
        %vm277 = vcmp.eq.s32.totalorder %v179, %v182
        %vm278 = vcmp.eq.s32.totalorder %v178, %v185
        %vm279 = vcmp.eq.s32.totalorder %v179, %v185
        %vm280 = vcmp.eq.s32.totalorder %v178, %v188
        %vm281 = vcmp.eq.s32.totalorder %v179, %v188
        %vm282 = vcmp.eq.s32.totalorder %v178, %v191
        %vm283 = vcmp.eq.s32.totalorder %v179, %v191
        %vm284 = vcmp.eq.s32.totalorder %v178, %v194
        %vm285 = vcmp.eq.s32.totalorder %v179, %v194
        %vm286 = vcmp.eq.s32.totalorder %v178, %v197
        %vm287 = vcmp.eq.s32.totalorder %v179, %v197
        %vm288 = vcmp.eq.s32.totalorder %v178, %v200
        %vm289 = vcmp.eq.s32.totalorder %v179, %v200
        %vm290 = vcmp.eq.s32.totalorder %v178, %v203
        %vm291 = vcmp.eq.s32.totalorder %v179, %v203
        %vm292 = vcmp.eq.s32.totalorder %v178, %v206
        %vm293 = vcmp.eq.s32.totalorder %v179, %v206
        %vm294 = vcmp.eq.s32.totalorder %v178, %v209
        %vm295 = vcmp.eq.s32.totalorder %v179, %v209
        %vm296 = vcmp.eq.s32.totalorder %v178, %v212
        %vm297 = vcmp.eq.s32.totalorder %v179, %v212
        %vm298 = vcmp.eq.s32.totalorder %v178, %v215
        %vm299 = vcmp.eq.s32.totalorder %v179, %v215
        %vm300 = vcmp.eq.s32.totalorder %v178, %v218
        %vm301 = vcmp.eq.s32.totalorder %v179, %v218
        %vm302 = vcmp.eq.s32.totalorder %v178, %v221
        %vm303 = vcmp.eq.s32.totalorder %v179, %v221
        %vm304 = vcmp.eq.s32.totalorder %v178, %v224
        %vm305 = vcmp.eq.s32.totalorder %v179, %v224
        %vm306 = vcmp.eq.s32.totalorder %v178, %v227
        %vm307 = vcmp.eq.s32.totalorder %v179, %v227
        %vm308 = vcmp.eq.s32.totalorder %v178, %v230
        %vm309 = vcmp.eq.s32.totalorder %v179, %v230
        %vm310 = vcmp.eq.s32.totalorder %v178, %v233
        %vm311 = vcmp.eq.s32.totalorder %v179, %v233
        %vm312 = vcmp.eq.s32.totalorder %v178, %v236
        %vm313 = vcmp.eq.s32.totalorder %v179, %v236
        %vm314 = vcmp.eq.s32.totalorder %v178, %v239
        %vm315 = vcmp.eq.s32.totalorder %v179, %v239
        %vm316 = vcmp.eq.s32.totalorder %v178, %v242
        %vm317 = vcmp.eq.s32.totalorder %v179, %v242
        %vm318 = vcmp.eq.s32.totalorder %v178, %v245
        %vm319 = vcmp.eq.s32.totalorder %v179, %v245
        %vm320 = vcmp.eq.s32.totalorder %v178, %v248
        %vm321 = vcmp.eq.s32.totalorder %v179, %v248
        %vm322 = vcmp.eq.s32.totalorder %v178, %v251
        %vm323 = vcmp.eq.s32.totalorder %v179, %v251
        %vm324 = vcmp.eq.s32.totalorder %v178, %v254
        %vm325 = vcmp.eq.s32.totalorder %v179, %v254
        %vm326 = vcmp.eq.s32.totalorder %v178, %v257
        %vm327 = vcmp.eq.s32.totalorder %v179, %v257
        %vm328 = vcmp.eq.s32.totalorder %v178, %v260
        %vm329 = vcmp.eq.s32.totalorder %v179, %v260
        %vm330 = vcmp.eq.s32.totalorder %v178, %v263
        %vm331 = vcmp.eq.s32.totalorder %v179, %v263
        %vm332 = vcmp.eq.s32.totalorder %v178, %v266
        %vm333 = vcmp.eq.s32.totalorder %v179, %v266
        %vm334 = vcmp.eq.s32.totalorder %v178, %v269
        %vm335 = vcmp.eq.s32.totalorder %v179, %v269
        %vm336 = vcmp.eq.s32.totalorder %v178, %v272
        %vm337 = vcmp.eq.s32.totalorder %v179, %v272
        %vm338 = vcmp.eq.s32.totalorder %v178, %v275
        %vm339 = vcmp.eq.s32.totalorder %v179, %v275
        %340 = vset.pattern.permute.xlu0 1
        %341 = vperm.xlu0 %340, %v145
        %v342 = vpop.permute.xlu0 %341
        %343 = vset.pattern.permute.xlu0 1
        %344 = vperm.xlu0 %343, %v146
        %v345 = vpop.permute.xlu0 %344
        %346 = vset.pattern.permute.xlu0 1
        %347 = vperm.xlu0 %346, %v147
        %v348 = vpop.permute.xlu0 %347
        %349 = vset.pattern.permute.xlu0 1
        %350 = vperm.xlu0 %349, %v148
        %v351 = vpop.permute.xlu0 %350
        %352 = vset.pattern.permute.xlu0 1
        %353 = vperm.xlu0 %352, %v149
        %v354 = vpop.permute.xlu0 %353
        %355 = vset.pattern.permute.xlu0 1
        %356 = vperm.xlu0 %355, %v150
        %v357 = vpop.permute.xlu0 %356
        %358 = vset.pattern.permute.xlu0 1
        %359 = vperm.xlu0 %358, %v151
        %v360 = vpop.permute.xlu0 %359
        %361 = vset.pattern.permute.xlu0 1
        %362 = vperm.xlu0 %361, %v152
        %v363 = vpop.permute.xlu0 %362
        %364 = vset.pattern.permute.xlu0 1
        %365 = vperm.xlu0 %364, %v153
        %v366 = vpop.permute.xlu0 %365
        %367 = vset.pattern.permute.xlu0 1
        %368 = vperm.xlu0 %367, %v154
        %v369 = vpop.permute.xlu0 %368
        %370 = vset.pattern.permute.xlu0 1
        %371 = vperm.xlu0 %370, %v155
        %v372 = vpop.permute.xlu0 %371
        %373 = vset.pattern.permute.xlu0 1
        %374 = vperm.xlu0 %373, %v156
        %v375 = vpop.permute.xlu0 %374
        %376 = vset.pattern.permute.xlu0 1
        %377 = vperm.xlu0 %376, %v157
        %v378 = vpop.permute.xlu0 %377
        %379 = vset.pattern.permute.xlu0 1
        %380 = vperm.xlu0 %379, %v158
        %v381 = vpop.permute.xlu0 %380
        %382 = vset.pattern.permute.xlu0 1
        %383 = vperm.xlu0 %382, %v159
        %v384 = vpop.permute.xlu0 %383
        %385 = vset.pattern.permute.xlu0 1
        %386 = vperm.xlu0 %385, %v160
        %v387 = vpop.permute.xlu0 %386
        %388 = vset.pattern.permute.xlu0 1
        %389 = vperm.xlu0 %388, %v161
        %v390 = vpop.permute.xlu0 %389
        %391 = vset.pattern.permute.xlu0 1
        %392 = vperm.xlu0 %391, %v162
        %v393 = vpop.permute.xlu0 %392
        %394 = vset.pattern.permute.xlu0 1
        %395 = vperm.xlu0 %394, %v163
        %v396 = vpop.permute.xlu0 %395
        %397 = vset.pattern.permute.xlu0 1
        %398 = vperm.xlu0 %397, %v164
        %v399 = vpop.permute.xlu0 %398
        %400 = vset.pattern.permute.xlu0 1
        %401 = vperm.xlu0 %400, %v165
        %v402 = vpop.permute.xlu0 %401
        %403 = vset.pattern.permute.xlu0 1
        %404 = vperm.xlu0 %403, %v166
        %v405 = vpop.permute.xlu0 %404
        %406 = vset.pattern.permute.xlu0 1
        %407 = vperm.xlu0 %406, %v167
        %v408 = vpop.permute.xlu0 %407
        %409 = vset.pattern.permute.xlu0 1
        %410 = vperm.xlu0 %409, %v168
        %v411 = vpop.permute.xlu0 %410
        %412 = vset.pattern.permute.xlu0 1
        %413 = vperm.xlu0 %412, %v169
        %v414 = vpop.permute.xlu0 %413
        %415 = vset.pattern.permute.xlu0 1
        %416 = vperm.xlu0 %415, %v170
        %v417 = vpop.permute.xlu0 %416
        %418 = vset.pattern.permute.xlu0 1
        %419 = vperm.xlu0 %418, %v171
        %v420 = vpop.permute.xlu0 %419
        %421 = vset.pattern.permute.xlu0 1
        %422 = vperm.xlu0 %421, %v172
        %v423 = vpop.permute.xlu0 %422
        %424 = vset.pattern.permute.xlu0 1
        %425 = vperm.xlu0 %424, %v173
        %v426 = vpop.permute.xlu0 %425
        %427 = vset.pattern.permute.xlu0 1
        %428 = vperm.xlu0 %427, %v174
        %v429 = vpop.permute.xlu0 %428
        %430 = vset.pattern.permute.xlu0 1
        %431 = vperm.xlu0 %430, %v175
        %v432 = vpop.permute.xlu0 %431
        %433 = vset.pattern.permute.xlu0 1
        %434 = vperm.xlu0 %433, %v176
        %v435 = vpop.permute.xlu0 %434
        %vm436 = vcmp.eq.s32.totalorder %v178, %v342
        %vm437 = vcmp.eq.s32.totalorder %v179, %v342
        %vm438 = vcmp.eq.s32.totalorder %v178, %v345
        %vm439 = vcmp.eq.s32.totalorder %v179, %v345
        %vm440 = vcmp.eq.s32.totalorder %v178, %v348
        %vm441 = vcmp.eq.s32.totalorder %v179, %v348
        %vm442 = vcmp.eq.s32.totalorder %v178, %v351
        %vm443 = vcmp.eq.s32.totalorder %v179, %v351
        %vm444 = vcmp.eq.s32.totalorder %v178, %v354
        %vm445 = vcmp.eq.s32.totalorder %v179, %v354
        %vm446 = vcmp.eq.s32.totalorder %v178, %v357
        %vm447 = vcmp.eq.s32.totalorder %v179, %v357
        %vm448 = vcmp.eq.s32.totalorder %v178, %v360
        %vm449 = vcmp.eq.s32.totalorder %v179, %v360
        %vm450 = vcmp.eq.s32.totalorder %v178, %v363
        %vm451 = vcmp.eq.s32.totalorder %v179, %v363
        %vm452 = vcmp.eq.s32.totalorder %v178, %v366
        %vm453 = vcmp.eq.s32.totalorder %v179, %v366
        %vm454 = vcmp.eq.s32.totalorder %v178, %v369
        %vm455 = vcmp.eq.s32.totalorder %v179, %v369
        %vm456 = vcmp.eq.s32.totalorder %v178, %v372
        %vm457 = vcmp.eq.s32.totalorder %v179, %v372
        %vm458 = vcmp.eq.s32.totalorder %v178, %v375
        %vm459 = vcmp.eq.s32.totalorder %v179, %v375
        %vm460 = vcmp.eq.s32.totalorder %v178, %v378
        %vm461 = vcmp.eq.s32.totalorder %v179, %v378
        %vm462 = vcmp.eq.s32.totalorder %v178, %v381
        %vm463 = vcmp.eq.s32.totalorder %v179, %v381
        %vm464 = vcmp.eq.s32.totalorder %v178, %v384
        %vm465 = vcmp.eq.s32.totalorder %v179, %v384
        %vm466 = vcmp.eq.s32.totalorder %v178, %v387
        %vm467 = vcmp.eq.s32.totalorder %v179, %v387
        %vm468 = vcmp.eq.s32.totalorder %v178, %v390
        %vm469 = vcmp.eq.s32.totalorder %v179, %v390
        %vm470 = vcmp.eq.s32.totalorder %v178, %v393
        %vm471 = vcmp.eq.s32.totalorder %v179, %v393
        %vm472 = vcmp.eq.s32.totalorder %v178, %v396
        %vm473 = vcmp.eq.s32.totalorder %v179, %v396
        %vm474 = vcmp.eq.s32.totalorder %v178, %v399
        %vm475 = vcmp.eq.s32.totalorder %v179, %v399
        %vm476 = vcmp.eq.s32.totalorder %v178, %v402
        %vm477 = vcmp.eq.s32.totalorder %v179, %v402
        %vm478 = vcmp.eq.s32.totalorder %v178, %v405
        %vm479 = vcmp.eq.s32.totalorder %v179, %v405
        %vm480 = vcmp.eq.s32.totalorder %v178, %v408
        %vm481 = vcmp.eq.s32.totalorder %v179, %v408
        %vm482 = vcmp.eq.s32.totalorder %v178, %v411
        %vm483 = vcmp.eq.s32.totalorder %v179, %v411
        %vm484 = vcmp.eq.s32.totalorder %v178, %v414
        %vm485 = vcmp.eq.s32.totalorder %v179, %v414
        %vm486 = vcmp.eq.s32.totalorder %v178, %v417
        %vm487 = vcmp.eq.s32.totalorder %v179, %v417
        %vm488 = vcmp.eq.s32.totalorder %v178, %v420
        %vm489 = vcmp.eq.s32.totalorder %v179, %v420
        %vm490 = vcmp.eq.s32.totalorder %v178, %v423
        %vm491 = vcmp.eq.s32.totalorder %v179, %v423
        %vm492 = vcmp.eq.s32.totalorder %v178, %v426
        %vm493 = vcmp.eq.s32.totalorder %v179, %v426
        %vm494 = vcmp.eq.s32.totalorder %v178, %v429
        %vm495 = vcmp.eq.s32.totalorder %v179, %v429
        %vm496 = vcmp.eq.s32.totalorder %v178, %v432
        %vm497 = vcmp.eq.s32.totalorder %v179, %v432
        %vm498 = vcmp.eq.s32.totalorder %v178, %v435
        %vm499 = vcmp.eq.s32.totalorder %v179, %v435
        %vm500 = vmor %vm276, %vm436
        %vm501 = vmor %vm277, %vm437
        %vm502 = vmor %vm278, %vm438
        %vm503 = vmor %vm279, %vm439
        %vm504 = vmor %vm280, %vm440
        %vm505 = vmor %vm281, %vm441
        %vm506 = vmor %vm282, %vm442
        %vm507 = vmor %vm283, %vm443
        %vm508 = vmor %vm284, %vm444
        %vm509 = vmor %vm285, %vm445
        %vm510 = vmor %vm286, %vm446
        %vm511 = vmor %vm287, %vm447
        %vm512 = vmor %vm288, %vm448
        %vm513 = vmor %vm289, %vm449
        %vm514 = vmor %vm290, %vm450
        %vm515 = vmor %vm291, %vm451
        %vm516 = vmor %vm292, %vm452
        %vm517 = vmor %vm293, %vm453
        %vm518 = vmor %vm294, %vm454
        %vm519 = vmor %vm295, %vm455
        %vm520 = vmor %vm296, %vm456
        %vm521 = vmor %vm297, %vm457
        %vm522 = vmor %vm298, %vm458
        %vm523 = vmor %vm299, %vm459
        %vm524 = vmor %vm300, %vm460
        %vm525 = vmor %vm301, %vm461
        %vm526 = vmor %vm302, %vm462
        %vm527 = vmor %vm303, %vm463
        %vm528 = vmor %vm304, %vm464
        %vm529 = vmor %vm305, %vm465
        %vm530 = vmor %vm306, %vm466
        %vm531 = vmor %vm307, %vm467
        %vm532 = vmor %vm308, %vm468
        %vm533 = vmor %vm309, %vm469
        %vm534 = vmor %vm310, %vm470
        %vm535 = vmor %vm311, %vm471
        %vm536 = vmor %vm312, %vm472
        %vm537 = vmor %vm313, %vm473
        %vm538 = vmor %vm314, %vm474
        %vm539 = vmor %vm315, %vm475
        %vm540 = vmor %vm316, %vm476
        %vm541 = vmor %vm317, %vm477
        %vm542 = vmor %vm318, %vm478
        %vm543 = vmor %vm319, %vm479
        %vm544 = vmor %vm320, %vm480
        %vm545 = vmor %vm321, %vm481
        %vm546 = vmor %vm322, %vm482
        %vm547 = vmor %vm323, %vm483
        %vm548 = vmor %vm324, %vm484
        %vm549 = vmor %vm325, %vm485
        %vm550 = vmor %vm326, %vm486
        %vm551 = vmor %vm327, %vm487
        %vm552 = vmor %vm328, %vm488
        %vm553 = vmor %vm329, %vm489
        %vm554 = vmor %vm330, %vm490
        %vm555 = vmor %vm331, %vm491
        %vm556 = vmor %vm332, %vm492
        %vm557 = vmor %vm333, %vm493
        %vm558 = vmor %vm334, %vm494
        %vm559 = vmor %vm335, %vm495
        %vm560 = vmor %vm336, %vm496
        %vm561 = vmor %vm337, %vm497
        %vm562 = vmor %vm338, %vm498
        %vm563 = vmor %vm339, %vm499
        %564 = vset.pattern.permute.xlu0 2
        %565 = vperm.xlu0 %564, %v145
        %v566 = vpop.permute.xlu0 %565
        %567 = vset.pattern.permute.xlu0 2
        %568 = vperm.xlu0 %567, %v146
        %v569 = vpop.permute.xlu0 %568
        %570 = vset.pattern.permute.xlu0 2
        %571 = vperm.xlu0 %570, %v147
        %v572 = vpop.permute.xlu0 %571
        %573 = vset.pattern.permute.xlu0 2
        %574 = vperm.xlu0 %573, %v148
        %v575 = vpop.permute.xlu0 %574
        %576 = vset.pattern.permute.xlu0 2
        %577 = vperm.xlu0 %576, %v149
        %v578 = vpop.permute.xlu0 %577
        %579 = vset.pattern.permute.xlu0 2
        %580 = vperm.xlu0 %579, %v150
        %v581 = vpop.permute.xlu0 %580
        %582 = vset.pattern.permute.xlu0 2
        %583 = vperm.xlu0 %582, %v151
        %v584 = vpop.permute.xlu0 %583
        %585 = vset.pattern.permute.xlu0 2
        %586 = vperm.xlu0 %585, %v152
        %v587 = vpop.permute.xlu0 %586
        %588 = vset.pattern.permute.xlu0 2
        %589 = vperm.xlu0 %588, %v153
        %v590 = vpop.permute.xlu0 %589
        %591 = vset.pattern.permute.xlu0 2
        %592 = vperm.xlu0 %591, %v154
        %v593 = vpop.permute.xlu0 %592
        %594 = vset.pattern.permute.xlu0 2
        %595 = vperm.xlu0 %594, %v155
        %v596 = vpop.permute.xlu0 %595
        %597 = vset.pattern.permute.xlu0 2
        %598 = vperm.xlu0 %597, %v156
        %v599 = vpop.permute.xlu0 %598
        %600 = vset.pattern.permute.xlu0 2
        %601 = vperm.xlu0 %600, %v157
        %v602 = vpop.permute.xlu0 %601
        %603 = vset.pattern.permute.xlu0 2
        %604 = vperm.xlu0 %603, %v158
        %v605 = vpop.permute.xlu0 %604
        %606 = vset.pattern.permute.xlu0 2
        %607 = vperm.xlu0 %606, %v159
        %v608 = vpop.permute.xlu0 %607
        %609 = vset.pattern.permute.xlu0 2
        %610 = vperm.xlu0 %609, %v160
        %v611 = vpop.permute.xlu0 %610
        %612 = vset.pattern.permute.xlu0 2
        %613 = vperm.xlu0 %612, %v161
        %v614 = vpop.permute.xlu0 %613
        %615 = vset.pattern.permute.xlu0 2
        %616 = vperm.xlu0 %615, %v162
        %v617 = vpop.permute.xlu0 %616
        %618 = vset.pattern.permute.xlu0 2
        %619 = vperm.xlu0 %618, %v163
        %v620 = vpop.permute.xlu0 %619
        %621 = vset.pattern.permute.xlu0 2
        %622 = vperm.xlu0 %621, %v164
        %v623 = vpop.permute.xlu0 %622
        %624 = vset.pattern.permute.xlu0 2
        %625 = vperm.xlu0 %624, %v165
        %v626 = vpop.permute.xlu0 %625
        %627 = vset.pattern.permute.xlu0 2
        %628 = vperm.xlu0 %627, %v166
        %v629 = vpop.permute.xlu0 %628
        %630 = vset.pattern.permute.xlu0 2
        %631 = vperm.xlu0 %630, %v167
        %v632 = vpop.permute.xlu0 %631
        %633 = vset.pattern.permute.xlu0 2
        %634 = vperm.xlu0 %633, %v168
        %v635 = vpop.permute.xlu0 %634
        %636 = vset.pattern.permute.xlu0 2
        %637 = vperm.xlu0 %636, %v169
        %v638 = vpop.permute.xlu0 %637
        %639 = vset.pattern.permute.xlu0 2
        %640 = vperm.xlu0 %639, %v170
        %v641 = vpop.permute.xlu0 %640
        %642 = vset.pattern.permute.xlu0 2
        %643 = vperm.xlu0 %642, %v171
        %v644 = vpop.permute.xlu0 %643
        %645 = vset.pattern.permute.xlu0 2
        %646 = vperm.xlu0 %645, %v172
        %v647 = vpop.permute.xlu0 %646
        %648 = vset.pattern.permute.xlu0 2
        %649 = vperm.xlu0 %648, %v173
        %v650 = vpop.permute.xlu0 %649
        %651 = vset.pattern.permute.xlu0 2
        %652 = vperm.xlu0 %651, %v174
        %v653 = vpop.permute.xlu0 %652
        %654 = vset.pattern.permute.xlu0 2
        %655 = vperm.xlu0 %654, %v175
        %v656 = vpop.permute.xlu0 %655
        %657 = vset.pattern.permute.xlu0 2
        %658 = vperm.xlu0 %657, %v176
        %v659 = vpop.permute.xlu0 %658
        %vm660 = vcmp.eq.s32.totalorder %v178, %v566
        %vm661 = vcmp.eq.s32.totalorder %v179, %v566
        %vm662 = vcmp.eq.s32.totalorder %v178, %v569
        %vm663 = vcmp.eq.s32.totalorder %v179, %v569
        %vm664 = vcmp.eq.s32.totalorder %v178, %v572
        %vm665 = vcmp.eq.s32.totalorder %v179, %v572
        %vm666 = vcmp.eq.s32.totalorder %v178, %v575
        %vm667 = vcmp.eq.s32.totalorder %v179, %v575
        %vm668 = vcmp.eq.s32.totalorder %v178, %v578
        %vm669 = vcmp.eq.s32.totalorder %v179, %v578
        %vm670 = vcmp.eq.s32.totalorder %v178, %v581
        %vm671 = vcmp.eq.s32.totalorder %v179, %v581
        %vm672 = vcmp.eq.s32.totalorder %v178, %v584
        %vm673 = vcmp.eq.s32.totalorder %v179, %v584
        %vm674 = vcmp.eq.s32.totalorder %v178, %v587
        %vm675 = vcmp.eq.s32.totalorder %v179, %v587
        %vm676 = vcmp.eq.s32.totalorder %v178, %v590
        %vm677 = vcmp.eq.s32.totalorder %v179, %v590
        %vm678 = vcmp.eq.s32.totalorder %v178, %v593
        %vm679 = vcmp.eq.s32.totalorder %v179, %v593
        %vm680 = vcmp.eq.s32.totalorder %v178, %v596
        %vm681 = vcmp.eq.s32.totalorder %v179, %v596
        %vm682 = vcmp.eq.s32.totalorder %v178, %v599
        %vm683 = vcmp.eq.s32.totalorder %v179, %v599
        %vm684 = vcmp.eq.s32.totalorder %v178, %v602
        %vm685 = vcmp.eq.s32.totalorder %v179, %v602
        %vm686 = vcmp.eq.s32.totalorder %v178, %v605
        %vm687 = vcmp.eq.s32.totalorder %v179, %v605
        %vm688 = vcmp.eq.s32.totalorder %v178, %v608
        %vm689 = vcmp.eq.s32.totalorder %v179, %v608
        %vm690 = vcmp.eq.s32.totalorder %v178, %v611
        %vm691 = vcmp.eq.s32.totalorder %v179, %v611
        %vm692 = vcmp.eq.s32.totalorder %v178, %v614
        %vm693 = vcmp.eq.s32.totalorder %v179, %v614
        %vm694 = vcmp.eq.s32.totalorder %v178, %v617
        %vm695 = vcmp.eq.s32.totalorder %v179, %v617
        %vm696 = vcmp.eq.s32.totalorder %v178, %v620
        %vm697 = vcmp.eq.s32.totalorder %v179, %v620
        %vm698 = vcmp.eq.s32.totalorder %v178, %v623
        %vm699 = vcmp.eq.s32.totalorder %v179, %v623
        %vm700 = vcmp.eq.s32.totalorder %v178, %v626
        %vm701 = vcmp.eq.s32.totalorder %v179, %v626
        %vm702 = vcmp.eq.s32.totalorder %v178, %v629
        %vm703 = vcmp.eq.s32.totalorder %v179, %v629
        %vm704 = vcmp.eq.s32.totalorder %v178, %v632
        %vm705 = vcmp.eq.s32.totalorder %v179, %v632
        %vm706 = vcmp.eq.s32.totalorder %v178, %v635
        %vm707 = vcmp.eq.s32.totalorder %v179, %v635
        %vm708 = vcmp.eq.s32.totalorder %v178, %v638
        %vm709 = vcmp.eq.s32.totalorder %v179, %v638
        %vm710 = vcmp.eq.s32.totalorder %v178, %v641
        %vm711 = vcmp.eq.s32.totalorder %v179, %v641
        %vm712 = vcmp.eq.s32.totalorder %v178, %v644
        %vm713 = vcmp.eq.s32.totalorder %v179, %v644
        %vm714 = vcmp.eq.s32.totalorder %v178, %v647
        %vm715 = vcmp.eq.s32.totalorder %v179, %v647
        %vm716 = vcmp.eq.s32.totalorder %v178, %v650
        %vm717 = vcmp.eq.s32.totalorder %v179, %v650
        %vm718 = vcmp.eq.s32.totalorder %v178, %v653
        %vm719 = vcmp.eq.s32.totalorder %v179, %v653
        %vm720 = vcmp.eq.s32.totalorder %v178, %v656
        %vm721 = vcmp.eq.s32.totalorder %v179, %v656
        %vm722 = vcmp.eq.s32.totalorder %v178, %v659
        %vm723 = vcmp.eq.s32.totalorder %v179, %v659
        %vm724 = vmor %vm500, %vm660
        %vm725 = vmor %vm501, %vm661
        %vm726 = vmor %vm502, %vm662
        %vm727 = vmor %vm503, %vm663
        %vm728 = vmor %vm504, %vm664
        %vm729 = vmor %vm505, %vm665
        %vm730 = vmor %vm506, %vm666
        %vm731 = vmor %vm507, %vm667
        %vm732 = vmor %vm508, %vm668
        %vm733 = vmor %vm509, %vm669
        %vm734 = vmor %vm510, %vm670
        %vm735 = vmor %vm511, %vm671
        %vm736 = vmor %vm512, %vm672
        %vm737 = vmor %vm513, %vm673
        %vm738 = vmor %vm514, %vm674
        %vm739 = vmor %vm515, %vm675
        %vm740 = vmor %vm516, %vm676
        %vm741 = vmor %vm517, %vm677
        %vm742 = vmor %vm518, %vm678
        %vm743 = vmor %vm519, %vm679
        %vm744 = vmor %vm520, %vm680
        %vm745 = vmor %vm521, %vm681
        %vm746 = vmor %vm522, %vm682
        %vm747 = vmor %vm523, %vm683
        %vm748 = vmor %vm524, %vm684
        %vm749 = vmor %vm525, %vm685
        %vm750 = vmor %vm526, %vm686
        %vm751 = vmor %vm527, %vm687
        %vm752 = vmor %vm528, %vm688
        %vm753 = vmor %vm529, %vm689
        %vm754 = vmor %vm530, %vm690
        %vm755 = vmor %vm531, %vm691
        %vm756 = vmor %vm532, %vm692
        %vm757 = vmor %vm533, %vm693
        %vm758 = vmor %vm534, %vm694
        %vm759 = vmor %vm535, %vm695
        %vm760 = vmor %vm536, %vm696
        %vm761 = vmor %vm537, %vm697
        %vm762 = vmor %vm538, %vm698
        %vm763 = vmor %vm539, %vm699
        %vm764 = vmor %vm540, %vm700
        %vm765 = vmor %vm541, %vm701
        %vm766 = vmor %vm542, %vm702
        %vm767 = vmor %vm543, %vm703
        %vm768 = vmor %vm544, %vm704
        %vm769 = vmor %vm545, %vm705
        %vm770 = vmor %vm546, %vm706
        %vm771 = vmor %vm547, %vm707
        %vm772 = vmor %vm548, %vm708
        %vm773 = vmor %vm549, %vm709
        %vm774 = vmor %vm550, %vm710
        %vm775 = vmor %vm551, %vm711
        %vm776 = vmor %vm552, %vm712
        %vm777 = vmor %vm553, %vm713
        %vm778 = vmor %vm554, %vm714
        %vm779 = vmor %vm555, %vm715
        %vm780 = vmor %vm556, %vm716
        %vm781 = vmor %vm557, %vm717
        %vm782 = vmor %vm558, %vm718
        %vm783 = vmor %vm559, %vm719
        %vm784 = vmor %vm560, %vm720
        %vm785 = vmor %vm561, %vm721
        %vm786 = vmor %vm562, %vm722
        %vm787 = vmor %vm563, %vm723
        %788 = vset.pattern.permute.xlu0 3
        %789 = vperm.xlu0 %788, %v145
        %v790 = vpop.permute.xlu0 %789
        %791 = vset.pattern.permute.xlu0 3
        %792 = vperm.xlu0 %791, %v146
        %v793 = vpop.permute.xlu0 %792
        %794 = vset.pattern.permute.xlu0 3
        %795 = vperm.xlu0 %794, %v147
        %v796 = vpop.permute.xlu0 %795
        %797 = vset.pattern.permute.xlu0 3
        %798 = vperm.xlu0 %797, %v148
        %v799 = vpop.permute.xlu0 %798
        %800 = vset.pattern.permute.xlu0 3
        %801 = vperm.xlu0 %800, %v149
        %v802 = vpop.permute.xlu0 %801
        %803 = vset.pattern.permute.xlu0 3
        %804 = vperm.xlu0 %803, %v150
        %v805 = vpop.permute.xlu0 %804
        %806 = vset.pattern.permute.xlu0 3
        %807 = vperm.xlu0 %806, %v151
        %v808 = vpop.permute.xlu0 %807
        %809 = vset.pattern.permute.xlu0 3
        %810 = vperm.xlu0 %809, %v152
        %v811 = vpop.permute.xlu0 %810
        %812 = vset.pattern.permute.xlu0 3
        %813 = vperm.xlu0 %812, %v153
        %v814 = vpop.permute.xlu0 %813
        %815 = vset.pattern.permute.xlu0 3
        %816 = vperm.xlu0 %815, %v154
        %v817 = vpop.permute.xlu0 %816
        %818 = vset.pattern.permute.xlu0 3
        %819 = vperm.xlu0 %818, %v155
        %v820 = vpop.permute.xlu0 %819
        %821 = vset.pattern.permute.xlu0 3
        %822 = vperm.xlu0 %821, %v156
        %v823 = vpop.permute.xlu0 %822
        %824 = vset.pattern.permute.xlu0 3
        %825 = vperm.xlu0 %824, %v157
        %v826 = vpop.permute.xlu0 %825
        %827 = vset.pattern.permute.xlu0 3
        %828 = vperm.xlu0 %827, %v158
        %v829 = vpop.permute.xlu0 %828
        %830 = vset.pattern.permute.xlu0 3
        %831 = vperm.xlu0 %830, %v159
        %v832 = vpop.permute.xlu0 %831
        %833 = vset.pattern.permute.xlu0 3
        %834 = vperm.xlu0 %833, %v160
        %v835 = vpop.permute.xlu0 %834
        %836 = vset.pattern.permute.xlu0 3
        %837 = vperm.xlu0 %836, %v161
        %v838 = vpop.permute.xlu0 %837
        %839 = vset.pattern.permute.xlu0 3
        %840 = vperm.xlu0 %839, %v162
        %v841 = vpop.permute.xlu0 %840
        %842 = vset.pattern.permute.xlu0 3
        %843 = vperm.xlu0 %842, %v163
        %v844 = vpop.permute.xlu0 %843
        %845 = vset.pattern.permute.xlu0 3
        %846 = vperm.xlu0 %845, %v164
        %v847 = vpop.permute.xlu0 %846
        %848 = vset.pattern.permute.xlu0 3
        %849 = vperm.xlu0 %848, %v165
        %v850 = vpop.permute.xlu0 %849
        %851 = vset.pattern.permute.xlu0 3
        %852 = vperm.xlu0 %851, %v166
        %v853 = vpop.permute.xlu0 %852
        %854 = vset.pattern.permute.xlu0 3
        %855 = vperm.xlu0 %854, %v167
        %v856 = vpop.permute.xlu0 %855
        %857 = vset.pattern.permute.xlu0 3
        %858 = vperm.xlu0 %857, %v168
        %v859 = vpop.permute.xlu0 %858
        %860 = vset.pattern.permute.xlu0 3
        %861 = vperm.xlu0 %860, %v169
        %v862 = vpop.permute.xlu0 %861
        %863 = vset.pattern.permute.xlu0 3
        %864 = vperm.xlu0 %863, %v170
        %v865 = vpop.permute.xlu0 %864
        %866 = vset.pattern.permute.xlu0 3
        %867 = vperm.xlu0 %866, %v171
        %v868 = vpop.permute.xlu0 %867
        %869 = vset.pattern.permute.xlu0 3
        %870 = vperm.xlu0 %869, %v172
        %v871 = vpop.permute.xlu0 %870
        %872 = vset.pattern.permute.xlu0 3
        %873 = vperm.xlu0 %872, %v173
        %v874 = vpop.permute.xlu0 %873
        %875 = vset.pattern.permute.xlu0 3
        %876 = vperm.xlu0 %875, %v174
        %v877 = vpop.permute.xlu0 %876
        %878 = vset.pattern.permute.xlu0 3
        %879 = vperm.xlu0 %878, %v175
        %v880 = vpop.permute.xlu0 %879
        %881 = vset.pattern.permute.xlu0 3
        %882 = vperm.xlu0 %881, %v176
        %v883 = vpop.permute.xlu0 %882
        %vm884 = vcmp.eq.s32.totalorder %v178, %v790
        %vm885 = vcmp.eq.s32.totalorder %v179, %v790
        %vm886 = vcmp.eq.s32.totalorder %v178, %v793
        %vm887 = vcmp.eq.s32.totalorder %v179, %v793
        %vm888 = vcmp.eq.s32.totalorder %v178, %v796
        %vm889 = vcmp.eq.s32.totalorder %v179, %v796
        %vm890 = vcmp.eq.s32.totalorder %v178, %v799
        %vm891 = vcmp.eq.s32.totalorder %v179, %v799
        %vm892 = vcmp.eq.s32.totalorder %v178, %v802
        %vm893 = vcmp.eq.s32.totalorder %v179, %v802
        %vm894 = vcmp.eq.s32.totalorder %v178, %v805
        %vm895 = vcmp.eq.s32.totalorder %v179, %v805
        %vm896 = vcmp.eq.s32.totalorder %v178, %v808
        %vm897 = vcmp.eq.s32.totalorder %v179, %v808
        %vm898 = vcmp.eq.s32.totalorder %v178, %v811
        %vm899 = vcmp.eq.s32.totalorder %v179, %v811
        %vm900 = vcmp.eq.s32.totalorder %v178, %v814
        %vm901 = vcmp.eq.s32.totalorder %v179, %v814
        %vm902 = vcmp.eq.s32.totalorder %v178, %v817
        %vm903 = vcmp.eq.s32.totalorder %v179, %v817
        %vm904 = vcmp.eq.s32.totalorder %v178, %v820
        %vm905 = vcmp.eq.s32.totalorder %v179, %v820
        %vm906 = vcmp.eq.s32.totalorder %v178, %v823
        %vm907 = vcmp.eq.s32.totalorder %v179, %v823
        %vm908 = vcmp.eq.s32.totalorder %v178, %v826
        %vm909 = vcmp.eq.s32.totalorder %v179, %v826
        %vm910 = vcmp.eq.s32.totalorder %v178, %v829
        %vm911 = vcmp.eq.s32.totalorder %v179, %v829
        %vm912 = vcmp.eq.s32.totalorder %v178, %v832
        %vm913 = vcmp.eq.s32.totalorder %v179, %v832
        %vm914 = vcmp.eq.s32.totalorder %v178, %v835
        %vm915 = vcmp.eq.s32.totalorder %v179, %v835
        %vm916 = vcmp.eq.s32.totalorder %v178, %v838
        %vm917 = vcmp.eq.s32.totalorder %v179, %v838
        %vm918 = vcmp.eq.s32.totalorder %v178, %v841
        %vm919 = vcmp.eq.s32.totalorder %v179, %v841
        %vm920 = vcmp.eq.s32.totalorder %v178, %v844
        %vm921 = vcmp.eq.s32.totalorder %v179, %v844
        %vm922 = vcmp.eq.s32.totalorder %v178, %v847
        %vm923 = vcmp.eq.s32.totalorder %v179, %v847
        %vm924 = vcmp.eq.s32.totalorder %v178, %v850
        %vm925 = vcmp.eq.s32.totalorder %v179, %v850
        %vm926 = vcmp.eq.s32.totalorder %v178, %v853
        %vm927 = vcmp.eq.s32.totalorder %v179, %v853
        %vm928 = vcmp.eq.s32.totalorder %v178, %v856
        %vm929 = vcmp.eq.s32.totalorder %v179, %v856
        %vm930 = vcmp.eq.s32.totalorder %v178, %v859
        %vm931 = vcmp.eq.s32.totalorder %v179, %v859
        %vm932 = vcmp.eq.s32.totalorder %v178, %v862
        %vm933 = vcmp.eq.s32.totalorder %v179, %v862
        %vm934 = vcmp.eq.s32.totalorder %v178, %v865
        %vm935 = vcmp.eq.s32.totalorder %v179, %v865
        %vm936 = vcmp.eq.s32.totalorder %v178, %v868
        %vm937 = vcmp.eq.s32.totalorder %v179, %v868
        %vm938 = vcmp.eq.s32.totalorder %v178, %v871
        %vm939 = vcmp.eq.s32.totalorder %v179, %v871
        %vm940 = vcmp.eq.s32.totalorder %v178, %v874
        %vm941 = vcmp.eq.s32.totalorder %v179, %v874
        %vm942 = vcmp.eq.s32.totalorder %v178, %v877
        %vm943 = vcmp.eq.s32.totalorder %v179, %v877
        %vm944 = vcmp.eq.s32.totalorder %v178, %v880
        %vm945 = vcmp.eq.s32.totalorder %v179, %v880
        %vm946 = vcmp.eq.s32.totalorder %v178, %v883
        %vm947 = vcmp.eq.s32.totalorder %v179, %v883
        %vm948 = vmor %vm724, %vm884
        %vm949 = vmor %vm725, %vm885
        %vm950 = vmor %vm726, %vm886
        %vm951 = vmor %vm727, %vm887
        %vm952 = vmor %vm728, %vm888
        %vm953 = vmor %vm729, %vm889
        %vm954 = vmor %vm730, %vm890
        %vm955 = vmor %vm731, %vm891
        %vm956 = vmor %vm732, %vm892
        %vm957 = vmor %vm733, %vm893
        %vm958 = vmor %vm734, %vm894
        %vm959 = vmor %vm735, %vm895
        %vm960 = vmor %vm736, %vm896
        %vm961 = vmor %vm737, %vm897
        %vm962 = vmor %vm738, %vm898
        %vm963 = vmor %vm739, %vm899
        %vm964 = vmor %vm740, %vm900
        %vm965 = vmor %vm741, %vm901
        %vm966 = vmor %vm742, %vm902
        %vm967 = vmor %vm743, %vm903
        %vm968 = vmor %vm744, %vm904
        %vm969 = vmor %vm745, %vm905
        %vm970 = vmor %vm746, %vm906
        %vm971 = vmor %vm747, %vm907
        %vm972 = vmor %vm748, %vm908
        %vm973 = vmor %vm749, %vm909
        %vm974 = vmor %vm750, %vm910
        %vm975 = vmor %vm751, %vm911
        %vm976 = vmor %vm752, %vm912
        %vm977 = vmor %vm753, %vm913
        %vm978 = vmor %vm754, %vm914
        %vm979 = vmor %vm755, %vm915
        %vm980 = vmor %vm756, %vm916
        %vm981 = vmor %vm757, %vm917
        %vm982 = vmor %vm758, %vm918
        %vm983 = vmor %vm759, %vm919
        %vm984 = vmor %vm760, %vm920
        %vm985 = vmor %vm761, %vm921
        %vm986 = vmor %vm762, %vm922
        %vm987 = vmor %vm763, %vm923
        %vm988 = vmor %vm764, %vm924
        %vm989 = vmor %vm765, %vm925
        %vm990 = vmor %vm766, %vm926
        %vm991 = vmor %vm767, %vm927
        %vm992 = vmor %vm768, %vm928
        %vm993 = vmor %vm769, %vm929
        %vm994 = vmor %vm770, %vm930
        %vm995 = vmor %vm771, %vm931
        %vm996 = vmor %vm772, %vm932
        %vm997 = vmor %vm773, %vm933
        %vm998 = vmor %vm774, %vm934
        %vm999 = vmor %vm775, %vm935
        %vm1000 = vmor %vm776, %vm936
        %vm1001 = vmor %vm777, %vm937
        %vm1002 = vmor %vm778, %vm938
        %vm1003 = vmor %vm779, %vm939
        %vm1004 = vmor %vm780, %vm940
        %vm1005 = vmor %vm781, %vm941
        %vm1006 = vmor %vm782, %vm942
        %vm1007 = vmor %vm783, %vm943
        %vm1008 = vmor %vm784, %vm944
        %vm1009 = vmor %vm785, %vm945
        %vm1010 = vmor %vm786, %vm946
        %vm1011 = vmor %vm787, %vm947
        %1012 = vset.pattern.permute.xlu0 4
        %1013 = vperm.xlu0 %1012, %v145
        %v1014 = vpop.permute.xlu0 %1013
        %1015 = vset.pattern.permute.xlu0 4
        %1016 = vperm.xlu0 %1015, %v146
        %v1017 = vpop.permute.xlu0 %1016
        %1018 = vset.pattern.permute.xlu0 4
        %1019 = vperm.xlu0 %1018, %v147
        %v1020 = vpop.permute.xlu0 %1019
        %1021 = vset.pattern.permute.xlu0 4
        %1022 = vperm.xlu0 %1021, %v148
        %v1023 = vpop.permute.xlu0 %1022
        %1024 = vset.pattern.permute.xlu0 4
        %1025 = vperm.xlu0 %1024, %v149
        %v1026 = vpop.permute.xlu0 %1025
        %1027 = vset.pattern.permute.xlu0 4
        %1028 = vperm.xlu0 %1027, %v150
        %v1029 = vpop.permute.xlu0 %1028
        %1030 = vset.pattern.permute.xlu0 4
        %1031 = vperm.xlu0 %1030, %v151
        %v1032 = vpop.permute.xlu0 %1031
        %1033 = vset.pattern.permute.xlu0 4
        %1034 = vperm.xlu0 %1033, %v152
        %v1035 = vpop.permute.xlu0 %1034
        %1036 = vset.pattern.permute.xlu0 4
        %1037 = vperm.xlu0 %1036, %v153
        %v1038 = vpop.permute.xlu0 %1037
        %1039 = vset.pattern.permute.xlu0 4
        %1040 = vperm.xlu0 %1039, %v154
        %v1041 = vpop.permute.xlu0 %1040
        %1042 = vset.pattern.permute.xlu0 4
        %1043 = vperm.xlu0 %1042, %v155
        %v1044 = vpop.permute.xlu0 %1043
        %1045 = vset.pattern.permute.xlu0 4
        %1046 = vperm.xlu0 %1045, %v156
        %v1047 = vpop.permute.xlu0 %1046
        %1048 = vset.pattern.permute.xlu0 4
        %1049 = vperm.xlu0 %1048, %v157
        %v1050 = vpop.permute.xlu0 %1049
        %1051 = vset.pattern.permute.xlu0 4
        %1052 = vperm.xlu0 %1051, %v158
        %v1053 = vpop.permute.xlu0 %1052
        %1054 = vset.pattern.permute.xlu0 4
        %1055 = vperm.xlu0 %1054, %v159
        %v1056 = vpop.permute.xlu0 %1055
        %1057 = vset.pattern.permute.xlu0 4
        %1058 = vperm.xlu0 %1057, %v160
        %v1059 = vpop.permute.xlu0 %1058
        %1060 = vset.pattern.permute.xlu0 4
        %1061 = vperm.xlu0 %1060, %v161
        %v1062 = vpop.permute.xlu0 %1061
        %1063 = vset.pattern.permute.xlu0 4
        %1064 = vperm.xlu0 %1063, %v162
        %v1065 = vpop.permute.xlu0 %1064
        %1066 = vset.pattern.permute.xlu0 4
        %1067 = vperm.xlu0 %1066, %v163
        %v1068 = vpop.permute.xlu0 %1067
        %1069 = vset.pattern.permute.xlu0 4
        %1070 = vperm.xlu0 %1069, %v164
        %v1071 = vpop.permute.xlu0 %1070
        %1072 = vset.pattern.permute.xlu0 4
        %1073 = vperm.xlu0 %1072, %v165
        %v1074 = vpop.permute.xlu0 %1073
        %1075 = vset.pattern.permute.xlu0 4
        %1076 = vperm.xlu0 %1075, %v166
        %v1077 = vpop.permute.xlu0 %1076
        %1078 = vset.pattern.permute.xlu0 4
        %1079 = vperm.xlu0 %1078, %v167
        %v1080 = vpop.permute.xlu0 %1079
        %1081 = vset.pattern.permute.xlu0 4
        %1082 = vperm.xlu0 %1081, %v168
        %v1083 = vpop.permute.xlu0 %1082
        %1084 = vset.pattern.permute.xlu0 4
        %1085 = vperm.xlu0 %1084, %v169
        %v1086 = vpop.permute.xlu0 %1085
        %1087 = vset.pattern.permute.xlu0 4
        %1088 = vperm.xlu0 %1087, %v170
        %v1089 = vpop.permute.xlu0 %1088
        %1090 = vset.pattern.permute.xlu0 4
        %1091 = vperm.xlu0 %1090, %v171
        %v1092 = vpop.permute.xlu0 %1091
        %1093 = vset.pattern.permute.xlu0 4
        %1094 = vperm.xlu0 %1093, %v172
        %v1095 = vpop.permute.xlu0 %1094
        %1096 = vset.pattern.permute.xlu0 4
        %1097 = vperm.xlu0 %1096, %v173
        %v1098 = vpop.permute.xlu0 %1097
        %1099 = vset.pattern.permute.xlu0 4
        %1100 = vperm.xlu0 %1099, %v174
        %v1101 = vpop.permute.xlu0 %1100
        %1102 = vset.pattern.permute.xlu0 4
        %1103 = vperm.xlu0 %1102, %v175
        %v1104 = vpop.permute.xlu0 %1103
        %1105 = vset.pattern.permute.xlu0 4
        %1106 = vperm.xlu0 %1105, %v176
        %v1107 = vpop.permute.xlu0 %1106
        %vm1108 = vcmp.eq.s32.totalorder %v178, %v1014
        %vm1109 = vcmp.eq.s32.totalorder %v179, %v1014
        %vm1110 = vcmp.eq.s32.totalorder %v178, %v1017
        %vm1111 = vcmp.eq.s32.totalorder %v179, %v1017
        %vm1112 = vcmp.eq.s32.totalorder %v178, %v1020
        %vm1113 = vcmp.eq.s32.totalorder %v179, %v1020
        %vm1114 = vcmp.eq.s32.totalorder %v178, %v1023
        %vm1115 = vcmp.eq.s32.totalorder %v179, %v1023
        %vm1116 = vcmp.eq.s32.totalorder %v178, %v1026
        %vm1117 = vcmp.eq.s32.totalorder %v179, %v1026
        %vm1118 = vcmp.eq.s32.totalorder %v178, %v1029
        %vm1119 = vcmp.eq.s32.totalorder %v179, %v1029
        %vm1120 = vcmp.eq.s32.totalorder %v178, %v1032
        %vm1121 = vcmp.eq.s32.totalorder %v179, %v1032
        %vm1122 = vcmp.eq.s32.totalorder %v178, %v1035
        %vm1123 = vcmp.eq.s32.totalorder %v179, %v1035
        %vm1124 = vcmp.eq.s32.totalorder %v178, %v1038
        %vm1125 = vcmp.eq.s32.totalorder %v179, %v1038
        %vm1126 = vcmp.eq.s32.totalorder %v178, %v1041
        %vm1127 = vcmp.eq.s32.totalorder %v179, %v1041
        %vm1128 = vcmp.eq.s32.totalorder %v178, %v1044
        %vm1129 = vcmp.eq.s32.totalorder %v179, %v1044
        %vm1130 = vcmp.eq.s32.totalorder %v178, %v1047
        %vm1131 = vcmp.eq.s32.totalorder %v179, %v1047
        %vm1132 = vcmp.eq.s32.totalorder %v178, %v1050
        %vm1133 = vcmp.eq.s32.totalorder %v179, %v1050
        %vm1134 = vcmp.eq.s32.totalorder %v178, %v1053
        %vm1135 = vcmp.eq.s32.totalorder %v179, %v1053
        %vm1136 = vcmp.eq.s32.totalorder %v178, %v1056
        %vm1137 = vcmp.eq.s32.totalorder %v179, %v1056
        %vm1138 = vcmp.eq.s32.totalorder %v178, %v1059
        %vm1139 = vcmp.eq.s32.totalorder %v179, %v1059
        %vm1140 = vcmp.eq.s32.totalorder %v178, %v1062
        %vm1141 = vcmp.eq.s32.totalorder %v179, %v1062
        %vm1142 = vcmp.eq.s32.totalorder %v178, %v1065
        %vm1143 = vcmp.eq.s32.totalorder %v179, %v1065
        %vm1144 = vcmp.eq.s32.totalorder %v178, %v1068
        %vm1145 = vcmp.eq.s32.totalorder %v179, %v1068
        %vm1146 = vcmp.eq.s32.totalorder %v178, %v1071
        %vm1147 = vcmp.eq.s32.totalorder %v179, %v1071
        %vm1148 = vcmp.eq.s32.totalorder %v178, %v1074
        %vm1149 = vcmp.eq.s32.totalorder %v179, %v1074
        %vm1150 = vcmp.eq.s32.totalorder %v178, %v1077
        %vm1151 = vcmp.eq.s32.totalorder %v179, %v1077
        %vm1152 = vcmp.eq.s32.totalorder %v178, %v1080
        %vm1153 = vcmp.eq.s32.totalorder %v179, %v1080
        %vm1154 = vcmp.eq.s32.totalorder %v178, %v1083
        %vm1155 = vcmp.eq.s32.totalorder %v179, %v1083
        %vm1156 = vcmp.eq.s32.totalorder %v178, %v1086
        %vm1157 = vcmp.eq.s32.totalorder %v179, %v1086
        %vm1158 = vcmp.eq.s32.totalorder %v178, %v1089
        %vm1159 = vcmp.eq.s32.totalorder %v179, %v1089
        %vm1160 = vcmp.eq.s32.totalorder %v178, %v1092
        %vm1161 = vcmp.eq.s32.totalorder %v179, %v1092
        %vm1162 = vcmp.eq.s32.totalorder %v178, %v1095
        %vm1163 = vcmp.eq.s32.totalorder %v179, %v1095
        %vm1164 = vcmp.eq.s32.totalorder %v178, %v1098
        %vm1165 = vcmp.eq.s32.totalorder %v179, %v1098
        %vm1166 = vcmp.eq.s32.totalorder %v178, %v1101
        %vm1167 = vcmp.eq.s32.totalorder %v179, %v1101
        %vm1168 = vcmp.eq.s32.totalorder %v178, %v1104
        %vm1169 = vcmp.eq.s32.totalorder %v179, %v1104
        %vm1170 = vcmp.eq.s32.totalorder %v178, %v1107
        %vm1171 = vcmp.eq.s32.totalorder %v179, %v1107
        %vm1172 = vmor %vm948, %vm1108
        %vm1173 = vmor %vm949, %vm1109
        %vm1174 = vmor %vm950, %vm1110
        %vm1175 = vmor %vm951, %vm1111
        %vm1176 = vmor %vm952, %vm1112
        %vm1177 = vmor %vm953, %vm1113
        %vm1178 = vmor %vm954, %vm1114
        %vm1179 = vmor %vm955, %vm1115
        %vm1180 = vmor %vm956, %vm1116
        %vm1181 = vmor %vm957, %vm1117
        %vm1182 = vmor %vm958, %vm1118
        %vm1183 = vmor %vm959, %vm1119
        %vm1184 = vmor %vm960, %vm1120
        %vm1185 = vmor %vm961, %vm1121
        %vm1186 = vmor %vm962, %vm1122
        %vm1187 = vmor %vm963, %vm1123
        %vm1188 = vmor %vm964, %vm1124
        %vm1189 = vmor %vm965, %vm1125
        %vm1190 = vmor %vm966, %vm1126
        %vm1191 = vmor %vm967, %vm1127
        %vm1192 = vmor %vm968, %vm1128
        %vm1193 = vmor %vm969, %vm1129
        %vm1194 = vmor %vm970, %vm1130
        %vm1195 = vmor %vm971, %vm1131
        %vm1196 = vmor %vm972, %vm1132
        %vm1197 = vmor %vm973, %vm1133
        %vm1198 = vmor %vm974, %vm1134
        %vm1199 = vmor %vm975, %vm1135
        %vm1200 = vmor %vm976, %vm1136
        %vm1201 = vmor %vm977, %vm1137
        %vm1202 = vmor %vm978, %vm1138
        %vm1203 = vmor %vm979, %vm1139
        %vm1204 = vmor %vm980, %vm1140
        %vm1205 = vmor %vm981, %vm1141
        %vm1206 = vmor %vm982, %vm1142
        %vm1207 = vmor %vm983, %vm1143
        %vm1208 = vmor %vm984, %vm1144
        %vm1209 = vmor %vm985, %vm1145
        %vm1210 = vmor %vm986, %vm1146
        %vm1211 = vmor %vm987, %vm1147
        %vm1212 = vmor %vm988, %vm1148
        %vm1213 = vmor %vm989, %vm1149
        %vm1214 = vmor %vm990, %vm1150
        %vm1215 = vmor %vm991, %vm1151
        %vm1216 = vmor %vm992, %vm1152
        %vm1217 = vmor %vm993, %vm1153
        %vm1218 = vmor %vm994, %vm1154
        %vm1219 = vmor %vm995, %vm1155
        %vm1220 = vmor %vm996, %vm1156
        %vm1221 = vmor %vm997, %vm1157
        %vm1222 = vmor %vm998, %vm1158
        %vm1223 = vmor %vm999, %vm1159
        %vm1224 = vmor %vm1000, %vm1160
        %vm1225 = vmor %vm1001, %vm1161
        %vm1226 = vmor %vm1002, %vm1162
        %vm1227 = vmor %vm1003, %vm1163
        %vm1228 = vmor %vm1004, %vm1164
        %vm1229 = vmor %vm1005, %vm1165
        %vm1230 = vmor %vm1006, %vm1166
        %vm1231 = vmor %vm1007, %vm1167
        %vm1232 = vmor %vm1008, %vm1168
        %vm1233 = vmor %vm1009, %vm1169
        %vm1234 = vmor %vm1010, %vm1170
        %vm1235 = vmor %vm1011, %vm1171
        %1236 = vset.pattern.permute.xlu0 5
        %1237 = vperm.xlu0 %1236, %v145
        %v1238 = vpop.permute.xlu0 %1237
        %1239 = vset.pattern.permute.xlu0 5
        %1240 = vperm.xlu0 %1239, %v146
        %v1241 = vpop.permute.xlu0 %1240
        %1242 = vset.pattern.permute.xlu0 5
        %1243 = vperm.xlu0 %1242, %v147
        %v1244 = vpop.permute.xlu0 %1243
        %1245 = vset.pattern.permute.xlu0 5
        %1246 = vperm.xlu0 %1245, %v148
        %v1247 = vpop.permute.xlu0 %1246
        %1248 = vset.pattern.permute.xlu0 5
        %1249 = vperm.xlu0 %1248, %v149
        %v1250 = vpop.permute.xlu0 %1249
        %1251 = vset.pattern.permute.xlu0 5
        %1252 = vperm.xlu0 %1251, %v150
        %v1253 = vpop.permute.xlu0 %1252
        %1254 = vset.pattern.permute.xlu0 5
        %1255 = vperm.xlu0 %1254, %v151
        %v1256 = vpop.permute.xlu0 %1255
        %1257 = vset.pattern.permute.xlu0 5
        %1258 = vperm.xlu0 %1257, %v152
        %v1259 = vpop.permute.xlu0 %1258
        %1260 = vset.pattern.permute.xlu0 5
        %1261 = vperm.xlu0 %1260, %v153
        %v1262 = vpop.permute.xlu0 %1261
        %1263 = vset.pattern.permute.xlu0 5
        %1264 = vperm.xlu0 %1263, %v154
        %v1265 = vpop.permute.xlu0 %1264
        %1266 = vset.pattern.permute.xlu0 5
        %1267 = vperm.xlu0 %1266, %v155
        %v1268 = vpop.permute.xlu0 %1267
        %1269 = vset.pattern.permute.xlu0 5
        %1270 = vperm.xlu0 %1269, %v156
        %v1271 = vpop.permute.xlu0 %1270
        %1272 = vset.pattern.permute.xlu0 5
        %1273 = vperm.xlu0 %1272, %v157
        %v1274 = vpop.permute.xlu0 %1273
        %1275 = vset.pattern.permute.xlu0 5
        %1276 = vperm.xlu0 %1275, %v158
        %v1277 = vpop.permute.xlu0 %1276
        %1278 = vset.pattern.permute.xlu0 5
        %1279 = vperm.xlu0 %1278, %v159
        %v1280 = vpop.permute.xlu0 %1279
        %1281 = vset.pattern.permute.xlu0 5
        %1282 = vperm.xlu0 %1281, %v160
        %v1283 = vpop.permute.xlu0 %1282
        %1284 = vset.pattern.permute.xlu0 5
        %1285 = vperm.xlu0 %1284, %v161
        %v1286 = vpop.permute.xlu0 %1285
        %1287 = vset.pattern.permute.xlu0 5
        %1288 = vperm.xlu0 %1287, %v162
        %v1289 = vpop.permute.xlu0 %1288
        %1290 = vset.pattern.permute.xlu0 5
        %1291 = vperm.xlu0 %1290, %v163
        %v1292 = vpop.permute.xlu0 %1291
        %1293 = vset.pattern.permute.xlu0 5
        %1294 = vperm.xlu0 %1293, %v164
        %v1295 = vpop.permute.xlu0 %1294
        %1296 = vset.pattern.permute.xlu0 5
        %1297 = vperm.xlu0 %1296, %v165
        %v1298 = vpop.permute.xlu0 %1297
        %1299 = vset.pattern.permute.xlu0 5
        %1300 = vperm.xlu0 %1299, %v166
        %v1301 = vpop.permute.xlu0 %1300
        %1302 = vset.pattern.permute.xlu0 5
        %1303 = vperm.xlu0 %1302, %v167
        %v1304 = vpop.permute.xlu0 %1303
        %1305 = vset.pattern.permute.xlu0 5
        %1306 = vperm.xlu0 %1305, %v168
        %v1307 = vpop.permute.xlu0 %1306
        %1308 = vset.pattern.permute.xlu0 5
        %1309 = vperm.xlu0 %1308, %v169
        %v1310 = vpop.permute.xlu0 %1309
        %1311 = vset.pattern.permute.xlu0 5
        %1312 = vperm.xlu0 %1311, %v170
        %v1313 = vpop.permute.xlu0 %1312
        %1314 = vset.pattern.permute.xlu0 5
        %1315 = vperm.xlu0 %1314, %v171
        %v1316 = vpop.permute.xlu0 %1315
        %1317 = vset.pattern.permute.xlu0 5
        %1318 = vperm.xlu0 %1317, %v172
        %v1319 = vpop.permute.xlu0 %1318
        %1320 = vset.pattern.permute.xlu0 5
        %1321 = vperm.xlu0 %1320, %v173
        %v1322 = vpop.permute.xlu0 %1321
        %1323 = vset.pattern.permute.xlu0 5
        %1324 = vperm.xlu0 %1323, %v174
        %v1325 = vpop.permute.xlu0 %1324
        %1326 = vset.pattern.permute.xlu0 5
        %1327 = vperm.xlu0 %1326, %v175
        %v1328 = vpop.permute.xlu0 %1327
        %1329 = vset.pattern.permute.xlu0 5
        %1330 = vperm.xlu0 %1329, %v176
        %v1331 = vpop.permute.xlu0 %1330
        %vm1332 = vcmp.eq.s32.totalorder %v178, %v1238
        %vm1333 = vcmp.eq.s32.totalorder %v179, %v1238
        %vm1334 = vcmp.eq.s32.totalorder %v178, %v1241
        %vm1335 = vcmp.eq.s32.totalorder %v179, %v1241
        %vm1336 = vcmp.eq.s32.totalorder %v178, %v1244
        %vm1337 = vcmp.eq.s32.totalorder %v179, %v1244
        %vm1338 = vcmp.eq.s32.totalorder %v178, %v1247
        %vm1339 = vcmp.eq.s32.totalorder %v179, %v1247
        %vm1340 = vcmp.eq.s32.totalorder %v178, %v1250
        %vm1341 = vcmp.eq.s32.totalorder %v179, %v1250
        %vm1342 = vcmp.eq.s32.totalorder %v178, %v1253
        %vm1343 = vcmp.eq.s32.totalorder %v179, %v1253
        %vm1344 = vcmp.eq.s32.totalorder %v178, %v1256
        %vm1345 = vcmp.eq.s32.totalorder %v179, %v1256
        %vm1346 = vcmp.eq.s32.totalorder %v178, %v1259
        %vm1347 = vcmp.eq.s32.totalorder %v179, %v1259
        %vm1348 = vcmp.eq.s32.totalorder %v178, %v1262
        %vm1349 = vcmp.eq.s32.totalorder %v179, %v1262
        %vm1350 = vcmp.eq.s32.totalorder %v178, %v1265
        %vm1351 = vcmp.eq.s32.totalorder %v179, %v1265
        %vm1352 = vcmp.eq.s32.totalorder %v178, %v1268
        %vm1353 = vcmp.eq.s32.totalorder %v179, %v1268
        %vm1354 = vcmp.eq.s32.totalorder %v178, %v1271
        %vm1355 = vcmp.eq.s32.totalorder %v179, %v1271
        %vm1356 = vcmp.eq.s32.totalorder %v178, %v1274
        %vm1357 = vcmp.eq.s32.totalorder %v179, %v1274
        %vm1358 = vcmp.eq.s32.totalorder %v178, %v1277
        %vm1359 = vcmp.eq.s32.totalorder %v179, %v1277
        %vm1360 = vcmp.eq.s32.totalorder %v178, %v1280
        %vm1361 = vcmp.eq.s32.totalorder %v179, %v1280
        %vm1362 = vcmp.eq.s32.totalorder %v178, %v1283
        %vm1363 = vcmp.eq.s32.totalorder %v179, %v1283
        %vm1364 = vcmp.eq.s32.totalorder %v178, %v1286
        %vm1365 = vcmp.eq.s32.totalorder %v179, %v1286
        %vm1366 = vcmp.eq.s32.totalorder %v178, %v1289
        %vm1367 = vcmp.eq.s32.totalorder %v179, %v1289
        %vm1368 = vcmp.eq.s32.totalorder %v178, %v1292
        %vm1369 = vcmp.eq.s32.totalorder %v179, %v1292
        %vm1370 = vcmp.eq.s32.totalorder %v178, %v1295
        %vm1371 = vcmp.eq.s32.totalorder %v179, %v1295
        %vm1372 = vcmp.eq.s32.totalorder %v178, %v1298
        %vm1373 = vcmp.eq.s32.totalorder %v179, %v1298
        %vm1374 = vcmp.eq.s32.totalorder %v178, %v1301
        %vm1375 = vcmp.eq.s32.totalorder %v179, %v1301
        %vm1376 = vcmp.eq.s32.totalorder %v178, %v1304
        %vm1377 = vcmp.eq.s32.totalorder %v179, %v1304
        %vm1378 = vcmp.eq.s32.totalorder %v178, %v1307
        %vm1379 = vcmp.eq.s32.totalorder %v179, %v1307
        %vm1380 = vcmp.eq.s32.totalorder %v178, %v1310
        %vm1381 = vcmp.eq.s32.totalorder %v179, %v1310
        %vm1382 = vcmp.eq.s32.totalorder %v178, %v1313
        %vm1383 = vcmp.eq.s32.totalorder %v179, %v1313
        %vm1384 = vcmp.eq.s32.totalorder %v178, %v1316
        %vm1385 = vcmp.eq.s32.totalorder %v179, %v1316
        %vm1386 = vcmp.eq.s32.totalorder %v178, %v1319
        %vm1387 = vcmp.eq.s32.totalorder %v179, %v1319
        %vm1388 = vcmp.eq.s32.totalorder %v178, %v1322
        %vm1389 = vcmp.eq.s32.totalorder %v179, %v1322
        %vm1390 = vcmp.eq.s32.totalorder %v178, %v1325
        %vm1391 = vcmp.eq.s32.totalorder %v179, %v1325
        %vm1392 = vcmp.eq.s32.totalorder %v178, %v1328
        %vm1393 = vcmp.eq.s32.totalorder %v179, %v1328
        %vm1394 = vcmp.eq.s32.totalorder %v178, %v1331
        %vm1395 = vcmp.eq.s32.totalorder %v179, %v1331
        %vm1396 = vmor %vm1172, %vm1332
        %vm1397 = vmor %vm1173, %vm1333
        %vm1398 = vmor %vm1174, %vm1334
        %vm1399 = vmor %vm1175, %vm1335
        %vm1400 = vmor %vm1176, %vm1336
        %vm1401 = vmor %vm1177, %vm1337
        %vm1402 = vmor %vm1178, %vm1338
        %vm1403 = vmor %vm1179, %vm1339
        %vm1404 = vmor %vm1180, %vm1340
        %vm1405 = vmor %vm1181, %vm1341
        %vm1406 = vmor %vm1182, %vm1342
        %vm1407 = vmor %vm1183, %vm1343
        %vm1408 = vmor %vm1184, %vm1344
        %vm1409 = vmor %vm1185, %vm1345
        %vm1410 = vmor %vm1186, %vm1346
        %vm1411 = vmor %vm1187, %vm1347
        %vm1412 = vmor %vm1188, %vm1348
        %vm1413 = vmor %vm1189, %vm1349
        %vm1414 = vmor %vm1190, %vm1350
        %vm1415 = vmor %vm1191, %vm1351
        %vm1416 = vmor %vm1192, %vm1352
        %vm1417 = vmor %vm1193, %vm1353
        %vm1418 = vmor %vm1194, %vm1354
        %vm1419 = vmor %vm1195, %vm1355
        %vm1420 = vmor %vm1196, %vm1356
        %vm1421 = vmor %vm1197, %vm1357
        %vm1422 = vmor %vm1198, %vm1358
        %vm1423 = vmor %vm1199, %vm1359
        %vm1424 = vmor %vm1200, %vm1360
        %vm1425 = vmor %vm1201, %vm1361
        %vm1426 = vmor %vm1202, %vm1362
        %vm1427 = vmor %vm1203, %vm1363
        %vm1428 = vmor %vm1204, %vm1364
        %vm1429 = vmor %vm1205, %vm1365
        %vm1430 = vmor %vm1206, %vm1366
        %vm1431 = vmor %vm1207, %vm1367
        %vm1432 = vmor %vm1208, %vm1368
        %vm1433 = vmor %vm1209, %vm1369
        %vm1434 = vmor %vm1210, %vm1370
        %vm1435 = vmor %vm1211, %vm1371
        %vm1436 = vmor %vm1212, %vm1372
        %vm1437 = vmor %vm1213, %vm1373
        %vm1438 = vmor %vm1214, %vm1374
        %vm1439 = vmor %vm1215, %vm1375
        %vm1440 = vmor %vm1216, %vm1376
        %vm1441 = vmor %vm1217, %vm1377
        %vm1442 = vmor %vm1218, %vm1378
        %vm1443 = vmor %vm1219, %vm1379
        %vm1444 = vmor %vm1220, %vm1380
        %vm1445 = vmor %vm1221, %vm1381
        %vm1446 = vmor %vm1222, %vm1382
        %vm1447 = vmor %vm1223, %vm1383
        %vm1448 = vmor %vm1224, %vm1384
        %vm1449 = vmor %vm1225, %vm1385
        %vm1450 = vmor %vm1226, %vm1386
        %vm1451 = vmor %vm1227, %vm1387
        %vm1452 = vmor %vm1228, %vm1388
        %vm1453 = vmor %vm1229, %vm1389
        %vm1454 = vmor %vm1230, %vm1390
        %vm1455 = vmor %vm1231, %vm1391
        %vm1456 = vmor %vm1232, %vm1392
        %vm1457 = vmor %vm1233, %vm1393
        %vm1458 = vmor %vm1234, %vm1394
        %vm1459 = vmor %vm1235, %vm1395
        %1460 = vset.pattern.permute.xlu0 6
        %1461 = vperm.xlu0 %1460, %v145
        %v1462 = vpop.permute.xlu0 %1461
        %1463 = vset.pattern.permute.xlu0 6
        %1464 = vperm.xlu0 %1463, %v146
        %v1465 = vpop.permute.xlu0 %1464
        %1466 = vset.pattern.permute.xlu0 6
        %1467 = vperm.xlu0 %1466, %v147
        %v1468 = vpop.permute.xlu0 %1467
        %1469 = vset.pattern.permute.xlu0 6
        %1470 = vperm.xlu0 %1469, %v148
        %v1471 = vpop.permute.xlu0 %1470
        %1472 = vset.pattern.permute.xlu0 6
        %1473 = vperm.xlu0 %1472, %v149
        %v1474 = vpop.permute.xlu0 %1473
        %1475 = vset.pattern.permute.xlu0 6
        %1476 = vperm.xlu0 %1475, %v150
        %v1477 = vpop.permute.xlu0 %1476
        %1478 = vset.pattern.permute.xlu0 6
        %1479 = vperm.xlu0 %1478, %v151
        %v1480 = vpop.permute.xlu0 %1479
        %1481 = vset.pattern.permute.xlu0 6
        %1482 = vperm.xlu0 %1481, %v152
        %v1483 = vpop.permute.xlu0 %1482
        %1484 = vset.pattern.permute.xlu0 6
        %1485 = vperm.xlu0 %1484, %v153
        %v1486 = vpop.permute.xlu0 %1485
        %1487 = vset.pattern.permute.xlu0 6
        %1488 = vperm.xlu0 %1487, %v154
        %v1489 = vpop.permute.xlu0 %1488
        %1490 = vset.pattern.permute.xlu0 6
        %1491 = vperm.xlu0 %1490, %v155
        %v1492 = vpop.permute.xlu0 %1491
        %1493 = vset.pattern.permute.xlu0 6
        %1494 = vperm.xlu0 %1493, %v156
        %v1495 = vpop.permute.xlu0 %1494
        %1496 = vset.pattern.permute.xlu0 6
        %1497 = vperm.xlu0 %1496, %v157
        %v1498 = vpop.permute.xlu0 %1497
        %1499 = vset.pattern.permute.xlu0 6
        %1500 = vperm.xlu0 %1499, %v158
        %v1501 = vpop.permute.xlu0 %1500
        %1502 = vset.pattern.permute.xlu0 6
        %1503 = vperm.xlu0 %1502, %v159
        %v1504 = vpop.permute.xlu0 %1503
        %1505 = vset.pattern.permute.xlu0 6
        %1506 = vperm.xlu0 %1505, %v160
        %v1507 = vpop.permute.xlu0 %1506
        %1508 = vset.pattern.permute.xlu0 6
        %1509 = vperm.xlu0 %1508, %v161
        %v1510 = vpop.permute.xlu0 %1509
        %1511 = vset.pattern.permute.xlu0 6
        %1512 = vperm.xlu0 %1511, %v162
        %v1513 = vpop.permute.xlu0 %1512
        %1514 = vset.pattern.permute.xlu0 6
        %1515 = vperm.xlu0 %1514, %v163
        %v1516 = vpop.permute.xlu0 %1515
        %1517 = vset.pattern.permute.xlu0 6
        %1518 = vperm.xlu0 %1517, %v164
        %v1519 = vpop.permute.xlu0 %1518
        %1520 = vset.pattern.permute.xlu0 6
        %1521 = vperm.xlu0 %1520, %v165
        %v1522 = vpop.permute.xlu0 %1521
        %1523 = vset.pattern.permute.xlu0 6
        %1524 = vperm.xlu0 %1523, %v166
        %v1525 = vpop.permute.xlu0 %1524
        %1526 = vset.pattern.permute.xlu0 6
        %1527 = vperm.xlu0 %1526, %v167
        %v1528 = vpop.permute.xlu0 %1527
        %1529 = vset.pattern.permute.xlu0 6
        %1530 = vperm.xlu0 %1529, %v168
        %v1531 = vpop.permute.xlu0 %1530
        %1532 = vset.pattern.permute.xlu0 6
        %1533 = vperm.xlu0 %1532, %v169
        %v1534 = vpop.permute.xlu0 %1533
        %1535 = vset.pattern.permute.xlu0 6
        %1536 = vperm.xlu0 %1535, %v170
        %v1537 = vpop.permute.xlu0 %1536
        %1538 = vset.pattern.permute.xlu0 6
        %1539 = vperm.xlu0 %1538, %v171
        %v1540 = vpop.permute.xlu0 %1539
        %1541 = vset.pattern.permute.xlu0 6
        %1542 = vperm.xlu0 %1541, %v172
        %v1543 = vpop.permute.xlu0 %1542
        %1544 = vset.pattern.permute.xlu0 6
        %1545 = vperm.xlu0 %1544, %v173
        %v1546 = vpop.permute.xlu0 %1545
        %1547 = vset.pattern.permute.xlu0 6
        %1548 = vperm.xlu0 %1547, %v174
        %v1549 = vpop.permute.xlu0 %1548
        %1550 = vset.pattern.permute.xlu0 6
        %1551 = vperm.xlu0 %1550, %v175
        %v1552 = vpop.permute.xlu0 %1551
        %1553 = vset.pattern.permute.xlu0 6
        %1554 = vperm.xlu0 %1553, %v176
        %v1555 = vpop.permute.xlu0 %1554
        %vm1556 = vcmp.eq.s32.totalorder %v178, %v1462
        %vm1557 = vcmp.eq.s32.totalorder %v179, %v1462
        %vm1558 = vcmp.eq.s32.totalorder %v178, %v1465
        %vm1559 = vcmp.eq.s32.totalorder %v179, %v1465
        %vm1560 = vcmp.eq.s32.totalorder %v178, %v1468
        %vm1561 = vcmp.eq.s32.totalorder %v179, %v1468
        %vm1562 = vcmp.eq.s32.totalorder %v178, %v1471
        %vm1563 = vcmp.eq.s32.totalorder %v179, %v1471
        %vm1564 = vcmp.eq.s32.totalorder %v178, %v1474
        %vm1565 = vcmp.eq.s32.totalorder %v179, %v1474
        %vm1566 = vcmp.eq.s32.totalorder %v178, %v1477
        %vm1567 = vcmp.eq.s32.totalorder %v179, %v1477
        %vm1568 = vcmp.eq.s32.totalorder %v178, %v1480
        %vm1569 = vcmp.eq.s32.totalorder %v179, %v1480
        %vm1570 = vcmp.eq.s32.totalorder %v178, %v1483
        %vm1571 = vcmp.eq.s32.totalorder %v179, %v1483
        %vm1572 = vcmp.eq.s32.totalorder %v178, %v1486
        %vm1573 = vcmp.eq.s32.totalorder %v179, %v1486
        %vm1574 = vcmp.eq.s32.totalorder %v178, %v1489
        %vm1575 = vcmp.eq.s32.totalorder %v179, %v1489
        %vm1576 = vcmp.eq.s32.totalorder %v178, %v1492
        %vm1577 = vcmp.eq.s32.totalorder %v179, %v1492
        %vm1578 = vcmp.eq.s32.totalorder %v178, %v1495
        %vm1579 = vcmp.eq.s32.totalorder %v179, %v1495
        %vm1580 = vcmp.eq.s32.totalorder %v178, %v1498
        %vm1581 = vcmp.eq.s32.totalorder %v179, %v1498
        %vm1582 = vcmp.eq.s32.totalorder %v178, %v1501
        %vm1583 = vcmp.eq.s32.totalorder %v179, %v1501
        %vm1584 = vcmp.eq.s32.totalorder %v178, %v1504
        %vm1585 = vcmp.eq.s32.totalorder %v179, %v1504
        %vm1586 = vcmp.eq.s32.totalorder %v178, %v1507
        %vm1587 = vcmp.eq.s32.totalorder %v179, %v1507
        %vm1588 = vcmp.eq.s32.totalorder %v178, %v1510
        %vm1589 = vcmp.eq.s32.totalorder %v179, %v1510
        %vm1590 = vcmp.eq.s32.totalorder %v178, %v1513
        %vm1591 = vcmp.eq.s32.totalorder %v179, %v1513
        %vm1592 = vcmp.eq.s32.totalorder %v178, %v1516
        %vm1593 = vcmp.eq.s32.totalorder %v179, %v1516
        %vm1594 = vcmp.eq.s32.totalorder %v178, %v1519
        %vm1595 = vcmp.eq.s32.totalorder %v179, %v1519
        %vm1596 = vcmp.eq.s32.totalorder %v178, %v1522
        %vm1597 = vcmp.eq.s32.totalorder %v179, %v1522
        %vm1598 = vcmp.eq.s32.totalorder %v178, %v1525
        %vm1599 = vcmp.eq.s32.totalorder %v179, %v1525
        %vm1600 = vcmp.eq.s32.totalorder %v178, %v1528
        %vm1601 = vcmp.eq.s32.totalorder %v179, %v1528
        %vm1602 = vcmp.eq.s32.totalorder %v178, %v1531
        %vm1603 = vcmp.eq.s32.totalorder %v179, %v1531
        %vm1604 = vcmp.eq.s32.totalorder %v178, %v1534
        %vm1605 = vcmp.eq.s32.totalorder %v179, %v1534
        %vm1606 = vcmp.eq.s32.totalorder %v178, %v1537
        %vm1607 = vcmp.eq.s32.totalorder %v179, %v1537
        %vm1608 = vcmp.eq.s32.totalorder %v178, %v1540
        %vm1609 = vcmp.eq.s32.totalorder %v179, %v1540
        %vm1610 = vcmp.eq.s32.totalorder %v178, %v1543
        %vm1611 = vcmp.eq.s32.totalorder %v179, %v1543
        %vm1612 = vcmp.eq.s32.totalorder %v178, %v1546
        %vm1613 = vcmp.eq.s32.totalorder %v179, %v1546
        %vm1614 = vcmp.eq.s32.totalorder %v178, %v1549
        %vm1615 = vcmp.eq.s32.totalorder %v179, %v1549
        %vm1616 = vcmp.eq.s32.totalorder %v178, %v1552
        %vm1617 = vcmp.eq.s32.totalorder %v179, %v1552
        %vm1618 = vcmp.eq.s32.totalorder %v178, %v1555
        %vm1619 = vcmp.eq.s32.totalorder %v179, %v1555
        %vm1620 = vmor %vm1396, %vm1556
        %vm1621 = vmor %vm1397, %vm1557
        %vm1622 = vmor %vm1398, %vm1558
        %vm1623 = vmor %vm1399, %vm1559
        %vm1624 = vmor %vm1400, %vm1560
        %vm1625 = vmor %vm1401, %vm1561
        %vm1626 = vmor %vm1402, %vm1562
        %vm1627 = vmor %vm1403, %vm1563
        %vm1628 = vmor %vm1404, %vm1564
        %vm1629 = vmor %vm1405, %vm1565
        %vm1630 = vmor %vm1406, %vm1566
        %vm1631 = vmor %vm1407, %vm1567
        %vm1632 = vmor %vm1408, %vm1568
        %vm1633 = vmor %vm1409, %vm1569
        %vm1634 = vmor %vm1410, %vm1570
        %vm1635 = vmor %vm1411, %vm1571
        %vm1636 = vmor %vm1412, %vm1572
        %vm1637 = vmor %vm1413, %vm1573
        %vm1638 = vmor %vm1414, %vm1574
        %vm1639 = vmor %vm1415, %vm1575
        %vm1640 = vmor %vm1416, %vm1576
        %vm1641 = vmor %vm1417, %vm1577
        %vm1642 = vmor %vm1418, %vm1578
        %vm1643 = vmor %vm1419, %vm1579
        %vm1644 = vmor %vm1420, %vm1580
        %vm1645 = vmor %vm1421, %vm1581
        %vm1646 = vmor %vm1422, %vm1582
        %vm1647 = vmor %vm1423, %vm1583
        %vm1648 = vmor %vm1424, %vm1584
        %vm1649 = vmor %vm1425, %vm1585
        %vm1650 = vmor %vm1426, %vm1586
        %vm1651 = vmor %vm1427, %vm1587
        %vm1652 = vmor %vm1428, %vm1588
        %vm1653 = vmor %vm1429, %vm1589
        %vm1654 = vmor %vm1430, %vm1590
        %vm1655 = vmor %vm1431, %vm1591
        %vm1656 = vmor %vm1432, %vm1592
        %vm1657 = vmor %vm1433, %vm1593
        %vm1658 = vmor %vm1434, %vm1594
        %vm1659 = vmor %vm1435, %vm1595
        %vm1660 = vmor %vm1436, %vm1596
        %vm1661 = vmor %vm1437, %vm1597
        %vm1662 = vmor %vm1438, %vm1598
        %vm1663 = vmor %vm1439, %vm1599
        %vm1664 = vmor %vm1440, %vm1600
        %vm1665 = vmor %vm1441, %vm1601
        %vm1666 = vmor %vm1442, %vm1602
        %vm1667 = vmor %vm1443, %vm1603
        %vm1668 = vmor %vm1444, %vm1604
        %vm1669 = vmor %vm1445, %vm1605
        %vm1670 = vmor %vm1446, %vm1606
        %vm1671 = vmor %vm1447, %vm1607
        %vm1672 = vmor %vm1448, %vm1608
        %vm1673 = vmor %vm1449, %vm1609
        %vm1674 = vmor %vm1450, %vm1610
        %vm1675 = vmor %vm1451, %vm1611
        %vm1676 = vmor %vm1452, %vm1612
        %vm1677 = vmor %vm1453, %vm1613
        %vm1678 = vmor %vm1454, %vm1614
        %vm1679 = vmor %vm1455, %vm1615
        %vm1680 = vmor %vm1456, %vm1616
        %vm1681 = vmor %vm1457, %vm1617
        %vm1682 = vmor %vm1458, %vm1618
        %vm1683 = vmor %vm1459, %vm1619
        %1684 = vset.pattern.permute.xlu0 7
        %1685 = vperm.xlu0 %1684, %v145
        %v1686 = vpop.permute.xlu0 %1685
        %1687 = vset.pattern.permute.xlu0 7
        %1688 = vperm.xlu0 %1687, %v146
        %v1689 = vpop.permute.xlu0 %1688
        %1690 = vset.pattern.permute.xlu0 7
        %1691 = vperm.xlu0 %1690, %v147
        %v1692 = vpop.permute.xlu0 %1691
        %1693 = vset.pattern.permute.xlu0 7
        %1694 = vperm.xlu0 %1693, %v148
        %v1695 = vpop.permute.xlu0 %1694
        %1696 = vset.pattern.permute.xlu0 7
        %1697 = vperm.xlu0 %1696, %v149
        %v1698 = vpop.permute.xlu0 %1697
        %1699 = vset.pattern.permute.xlu0 7
        %1700 = vperm.xlu0 %1699, %v150
        %v1701 = vpop.permute.xlu0 %1700
        %1702 = vset.pattern.permute.xlu0 7
        %1703 = vperm.xlu0 %1702, %v151
        %v1704 = vpop.permute.xlu0 %1703
        %1705 = vset.pattern.permute.xlu0 7
        %1706 = vperm.xlu0 %1705, %v152
        %v1707 = vpop.permute.xlu0 %1706
        %1708 = vset.pattern.permute.xlu0 7
        %1709 = vperm.xlu0 %1708, %v153
        %v1710 = vpop.permute.xlu0 %1709
        %1711 = vset.pattern.permute.xlu0 7
        %1712 = vperm.xlu0 %1711, %v154
        %v1713 = vpop.permute.xlu0 %1712
        %1714 = vset.pattern.permute.xlu0 7
        %1715 = vperm.xlu0 %1714, %v155
        %v1716 = vpop.permute.xlu0 %1715
        %1717 = vset.pattern.permute.xlu0 7
        %1718 = vperm.xlu0 %1717, %v156
        %v1719 = vpop.permute.xlu0 %1718
        %1720 = vset.pattern.permute.xlu0 7
        %1721 = vperm.xlu0 %1720, %v157
        %v1722 = vpop.permute.xlu0 %1721
        %1723 = vset.pattern.permute.xlu0 7
        %1724 = vperm.xlu0 %1723, %v158
        %v1725 = vpop.permute.xlu0 %1724
        %1726 = vset.pattern.permute.xlu0 7
        %1727 = vperm.xlu0 %1726, %v159
        %v1728 = vpop.permute.xlu0 %1727
        %1729 = vset.pattern.permute.xlu0 7
        %1730 = vperm.xlu0 %1729, %v160
        %v1731 = vpop.permute.xlu0 %1730
        %1732 = vset.pattern.permute.xlu0 7
        %1733 = vperm.xlu0 %1732, %v161
        %v1734 = vpop.permute.xlu0 %1733
        %1735 = vset.pattern.permute.xlu0 7
        %1736 = vperm.xlu0 %1735, %v162
        %v1737 = vpop.permute.xlu0 %1736
        %1738 = vset.pattern.permute.xlu0 7
        %1739 = vperm.xlu0 %1738, %v163
        %v1740 = vpop.permute.xlu0 %1739
        %1741 = vset.pattern.permute.xlu0 7
        %1742 = vperm.xlu0 %1741, %v164
        %v1743 = vpop.permute.xlu0 %1742
        %1744 = vset.pattern.permute.xlu0 7
        %1745 = vperm.xlu0 %1744, %v165
        %v1746 = vpop.permute.xlu0 %1745
        %1747 = vset.pattern.permute.xlu0 7
        %1748 = vperm.xlu0 %1747, %v166
        %v1749 = vpop.permute.xlu0 %1748
        %1750 = vset.pattern.permute.xlu0 7
        %1751 = vperm.xlu0 %1750, %v167
        %v1752 = vpop.permute.xlu0 %1751
        %1753 = vset.pattern.permute.xlu0 7
        %1754 = vperm.xlu0 %1753, %v168
        %v1755 = vpop.permute.xlu0 %1754
        %1756 = vset.pattern.permute.xlu0 7
        %1757 = vperm.xlu0 %1756, %v169
        %v1758 = vpop.permute.xlu0 %1757
        %1759 = vset.pattern.permute.xlu0 7
        %1760 = vperm.xlu0 %1759, %v170
        %v1761 = vpop.permute.xlu0 %1760
        %1762 = vset.pattern.permute.xlu0 7
        %1763 = vperm.xlu0 %1762, %v171
        %v1764 = vpop.permute.xlu0 %1763
        %1765 = vset.pattern.permute.xlu0 7
        %1766 = vperm.xlu0 %1765, %v172
        %v1767 = vpop.permute.xlu0 %1766
        %1768 = vset.pattern.permute.xlu0 7
        %1769 = vperm.xlu0 %1768, %v173
        %v1770 = vpop.permute.xlu0 %1769
        %1771 = vset.pattern.permute.xlu0 7
        %1772 = vperm.xlu0 %1771, %v174
        %v1773 = vpop.permute.xlu0 %1772
        %1774 = vset.pattern.permute.xlu0 7
        %1775 = vperm.xlu0 %1774, %v175
        %v1776 = vpop.permute.xlu0 %1775
        %1777 = vset.pattern.permute.xlu0 7
        %1778 = vperm.xlu0 %1777, %v176
        %v1779 = vpop.permute.xlu0 %1778
        %vm1780 = vcmp.eq.s32.totalorder %v178, %v1686
        %vm1781 = vcmp.eq.s32.totalorder %v179, %v1686
        %vm1782 = vcmp.eq.s32.totalorder %v178, %v1689
        %vm1783 = vcmp.eq.s32.totalorder %v179, %v1689
        %vm1784 = vcmp.eq.s32.totalorder %v178, %v1692
        %vm1785 = vcmp.eq.s32.totalorder %v179, %v1692
        %vm1786 = vcmp.eq.s32.totalorder %v178, %v1695
        %vm1787 = vcmp.eq.s32.totalorder %v179, %v1695
        %vm1788 = vcmp.eq.s32.totalorder %v178, %v1698
        %vm1789 = vcmp.eq.s32.totalorder %v179, %v1698
        %vm1790 = vcmp.eq.s32.totalorder %v178, %v1701
        %vm1791 = vcmp.eq.s32.totalorder %v179, %v1701
        %vm1792 = vcmp.eq.s32.totalorder %v178, %v1704
        %vm1793 = vcmp.eq.s32.totalorder %v179, %v1704
        %vm1794 = vcmp.eq.s32.totalorder %v178, %v1707
        %vm1795 = vcmp.eq.s32.totalorder %v179, %v1707
        %vm1796 = vcmp.eq.s32.totalorder %v178, %v1710
        %vm1797 = vcmp.eq.s32.totalorder %v179, %v1710
        %vm1798 = vcmp.eq.s32.totalorder %v178, %v1713
        %vm1799 = vcmp.eq.s32.totalorder %v179, %v1713
        %vm1800 = vcmp.eq.s32.totalorder %v178, %v1716
        %vm1801 = vcmp.eq.s32.totalorder %v179, %v1716
        %vm1802 = vcmp.eq.s32.totalorder %v178, %v1719
        %vm1803 = vcmp.eq.s32.totalorder %v179, %v1719
        %vm1804 = vcmp.eq.s32.totalorder %v178, %v1722
        %vm1805 = vcmp.eq.s32.totalorder %v179, %v1722
        %vm1806 = vcmp.eq.s32.totalorder %v178, %v1725
        %vm1807 = vcmp.eq.s32.totalorder %v179, %v1725
        %vm1808 = vcmp.eq.s32.totalorder %v178, %v1728
        %vm1809 = vcmp.eq.s32.totalorder %v179, %v1728
        %vm1810 = vcmp.eq.s32.totalorder %v178, %v1731
        %vm1811 = vcmp.eq.s32.totalorder %v179, %v1731
        %vm1812 = vcmp.eq.s32.totalorder %v178, %v1734
        %vm1813 = vcmp.eq.s32.totalorder %v179, %v1734
        %vm1814 = vcmp.eq.s32.totalorder %v178, %v1737
        %vm1815 = vcmp.eq.s32.totalorder %v179, %v1737
        %vm1816 = vcmp.eq.s32.totalorder %v178, %v1740
        %vm1817 = vcmp.eq.s32.totalorder %v179, %v1740
        %vm1818 = vcmp.eq.s32.totalorder %v178, %v1743
        %vm1819 = vcmp.eq.s32.totalorder %v179, %v1743
        %vm1820 = vcmp.eq.s32.totalorder %v178, %v1746
        %vm1821 = vcmp.eq.s32.totalorder %v179, %v1746
        %vm1822 = vcmp.eq.s32.totalorder %v178, %v1749
        %vm1823 = vcmp.eq.s32.totalorder %v179, %v1749
        %vm1824 = vcmp.eq.s32.totalorder %v178, %v1752
        %vm1825 = vcmp.eq.s32.totalorder %v179, %v1752
        %vm1826 = vcmp.eq.s32.totalorder %v178, %v1755
        %vm1827 = vcmp.eq.s32.totalorder %v179, %v1755
        %vm1828 = vcmp.eq.s32.totalorder %v178, %v1758
        %vm1829 = vcmp.eq.s32.totalorder %v179, %v1758
        %vm1830 = vcmp.eq.s32.totalorder %v178, %v1761
        %vm1831 = vcmp.eq.s32.totalorder %v179, %v1761
        %vm1832 = vcmp.eq.s32.totalorder %v178, %v1764
        %vm1833 = vcmp.eq.s32.totalorder %v179, %v1764
        %vm1834 = vcmp.eq.s32.totalorder %v178, %v1767
        %vm1835 = vcmp.eq.s32.totalorder %v179, %v1767
        %vm1836 = vcmp.eq.s32.totalorder %v178, %v1770
        %vm1837 = vcmp.eq.s32.totalorder %v179, %v1770
        %vm1838 = vcmp.eq.s32.totalorder %v178, %v1773
        %vm1839 = vcmp.eq.s32.totalorder %v179, %v1773
        %vm1840 = vcmp.eq.s32.totalorder %v178, %v1776
        %vm1841 = vcmp.eq.s32.totalorder %v179, %v1776
        %vm1842 = vcmp.eq.s32.totalorder %v178, %v1779
        %vm1843 = vcmp.eq.s32.totalorder %v179, %v1779
        %vm1844 = vmor %vm1620, %vm1780
        %vm1845 = vmor %vm1621, %vm1781
        %vm1846 = vmor %vm1622, %vm1782
        %vm1847 = vmor %vm1623, %vm1783
        %vm1848 = vmor %vm1624, %vm1784
        %vm1849 = vmor %vm1625, %vm1785
        %vm1850 = vmor %vm1626, %vm1786
        %vm1851 = vmor %vm1627, %vm1787
        %vm1852 = vmor %vm1628, %vm1788
        %vm1853 = vmor %vm1629, %vm1789
        %vm1854 = vmor %vm1630, %vm1790
        %vm1855 = vmor %vm1631, %vm1791
        %vm1856 = vmor %vm1632, %vm1792
        %vm1857 = vmor %vm1633, %vm1793
        %vm1858 = vmor %vm1634, %vm1794
        %vm1859 = vmor %vm1635, %vm1795
        %vm1860 = vmor %vm1636, %vm1796
        %vm1861 = vmor %vm1637, %vm1797
        %vm1862 = vmor %vm1638, %vm1798
        %vm1863 = vmor %vm1639, %vm1799
        %vm1864 = vmor %vm1640, %vm1800
        %vm1865 = vmor %vm1641, %vm1801
        %vm1866 = vmor %vm1642, %vm1802
        %vm1867 = vmor %vm1643, %vm1803
        %vm1868 = vmor %vm1644, %vm1804
        %vm1869 = vmor %vm1645, %vm1805
        %vm1870 = vmor %vm1646, %vm1806
        %vm1871 = vmor %vm1647, %vm1807
        %vm1872 = vmor %vm1648, %vm1808
        %vm1873 = vmor %vm1649, %vm1809
        %vm1874 = vmor %vm1650, %vm1810
        %vm1875 = vmor %vm1651, %vm1811
        %vm1876 = vmor %vm1652, %vm1812
        %vm1877 = vmor %vm1653, %vm1813
        %vm1878 = vmor %vm1654, %vm1814
        %vm1879 = vmor %vm1655, %vm1815
        %vm1880 = vmor %vm1656, %vm1816
        %vm1881 = vmor %vm1657, %vm1817
        %vm1882 = vmor %vm1658, %vm1818
        %vm1883 = vmor %vm1659, %vm1819
        %vm1884 = vmor %vm1660, %vm1820
        %vm1885 = vmor %vm1661, %vm1821
        %vm1886 = vmor %vm1662, %vm1822
        %vm1887 = vmor %vm1663, %vm1823
        %vm1888 = vmor %vm1664, %vm1824
        %vm1889 = vmor %vm1665, %vm1825
        %vm1890 = vmor %vm1666, %vm1826
        %vm1891 = vmor %vm1667, %vm1827
        %vm1892 = vmor %vm1668, %vm1828
        %vm1893 = vmor %vm1669, %vm1829
        %vm1894 = vmor %vm1670, %vm1830
        %vm1895 = vmor %vm1671, %vm1831
        %vm1896 = vmor %vm1672, %vm1832
        %vm1897 = vmor %vm1673, %vm1833
        %vm1898 = vmor %vm1674, %vm1834
        %vm1899 = vmor %vm1675, %vm1835
        %vm1900 = vmor %vm1676, %vm1836
        %vm1901 = vmor %vm1677, %vm1837
        %vm1902 = vmor %vm1678, %vm1838
        %vm1903 = vmor %vm1679, %vm1839
        %vm1904 = vmor %vm1680, %vm1840
        %vm1905 = vmor %vm1681, %vm1841
        %vm1906 = vmor %vm1682, %vm1842
        %vm1907 = vmor %vm1683, %vm1843
        %1908 = vset.pattern.permute.xlu0 8
        %1909 = vperm.xlu0 %1908, %v145
        %v1910 = vpop.permute.xlu0 %1909
        %1911 = vset.pattern.permute.xlu0 8
        %1912 = vperm.xlu0 %1911, %v146
        %v1913 = vpop.permute.xlu0 %1912
        %1914 = vset.pattern.permute.xlu0 8
        %1915 = vperm.xlu0 %1914, %v147
        %v1916 = vpop.permute.xlu0 %1915
        %1917 = vset.pattern.permute.xlu0 8
        %1918 = vperm.xlu0 %1917, %v148
        %v1919 = vpop.permute.xlu0 %1918
        %1920 = vset.pattern.permute.xlu0 8
        %1921 = vperm.xlu0 %1920, %v149
        %v1922 = vpop.permute.xlu0 %1921
        %1923 = vset.pattern.permute.xlu0 8
        %1924 = vperm.xlu0 %1923, %v150
        %v1925 = vpop.permute.xlu0 %1924
        %1926 = vset.pattern.permute.xlu0 8
        %1927 = vperm.xlu0 %1926, %v151
        %v1928 = vpop.permute.xlu0 %1927
        %1929 = vset.pattern.permute.xlu0 8
        %1930 = vperm.xlu0 %1929, %v152
        %v1931 = vpop.permute.xlu0 %1930
        %1932 = vset.pattern.permute.xlu0 8
        %1933 = vperm.xlu0 %1932, %v153
        %v1934 = vpop.permute.xlu0 %1933
        %1935 = vset.pattern.permute.xlu0 8
        %1936 = vperm.xlu0 %1935, %v154
        %v1937 = vpop.permute.xlu0 %1936
        %1938 = vset.pattern.permute.xlu0 8
        %1939 = vperm.xlu0 %1938, %v155
        %v1940 = vpop.permute.xlu0 %1939
        %1941 = vset.pattern.permute.xlu0 8
        %1942 = vperm.xlu0 %1941, %v156
        %v1943 = vpop.permute.xlu0 %1942
        %1944 = vset.pattern.permute.xlu0 8
        %1945 = vperm.xlu0 %1944, %v157
        %v1946 = vpop.permute.xlu0 %1945
        %1947 = vset.pattern.permute.xlu0 8
        %1948 = vperm.xlu0 %1947, %v158
        %v1949 = vpop.permute.xlu0 %1948
        %1950 = vset.pattern.permute.xlu0 8
        %1951 = vperm.xlu0 %1950, %v159
        %v1952 = vpop.permute.xlu0 %1951
        %1953 = vset.pattern.permute.xlu0 8
        %1954 = vperm.xlu0 %1953, %v160
        %v1955 = vpop.permute.xlu0 %1954
        %1956 = vset.pattern.permute.xlu0 8
        %1957 = vperm.xlu0 %1956, %v161
        %v1958 = vpop.permute.xlu0 %1957
        %1959 = vset.pattern.permute.xlu0 8
        %1960 = vperm.xlu0 %1959, %v162
        %v1961 = vpop.permute.xlu0 %1960
        %1962 = vset.pattern.permute.xlu0 8
        %1963 = vperm.xlu0 %1962, %v163
        %v1964 = vpop.permute.xlu0 %1963
        %1965 = vset.pattern.permute.xlu0 8
        %1966 = vperm.xlu0 %1965, %v164
        %v1967 = vpop.permute.xlu0 %1966
        %1968 = vset.pattern.permute.xlu0 8
        %1969 = vperm.xlu0 %1968, %v165
        %v1970 = vpop.permute.xlu0 %1969
        %1971 = vset.pattern.permute.xlu0 8
        %1972 = vperm.xlu0 %1971, %v166
        %v1973 = vpop.permute.xlu0 %1972
        %1974 = vset.pattern.permute.xlu0 8
        %1975 = vperm.xlu0 %1974, %v167
        %v1976 = vpop.permute.xlu0 %1975
        %1977 = vset.pattern.permute.xlu0 8
        %1978 = vperm.xlu0 %1977, %v168
        %v1979 = vpop.permute.xlu0 %1978
        %1980 = vset.pattern.permute.xlu0 8
        %1981 = vperm.xlu0 %1980, %v169
        %v1982 = vpop.permute.xlu0 %1981
        %1983 = vset.pattern.permute.xlu0 8
        %1984 = vperm.xlu0 %1983, %v170
        %v1985 = vpop.permute.xlu0 %1984
        %1986 = vset.pattern.permute.xlu0 8
        %1987 = vperm.xlu0 %1986, %v171
        %v1988 = vpop.permute.xlu0 %1987
        %1989 = vset.pattern.permute.xlu0 8
        %1990 = vperm.xlu0 %1989, %v172
        %v1991 = vpop.permute.xlu0 %1990
        %1992 = vset.pattern.permute.xlu0 8
        %1993 = vperm.xlu0 %1992, %v173
        %v1994 = vpop.permute.xlu0 %1993
        %1995 = vset.pattern.permute.xlu0 8
        %1996 = vperm.xlu0 %1995, %v174
        %v1997 = vpop.permute.xlu0 %1996
        %1998 = vset.pattern.permute.xlu0 8
        %1999 = vperm.xlu0 %1998, %v175
        %v2000 = vpop.permute.xlu0 %1999
        %2001 = vset.pattern.permute.xlu0 8
        %2002 = vperm.xlu0 %2001, %v176
        %v2003 = vpop.permute.xlu0 %2002
        %vm2004 = vcmp.eq.s32.totalorder %v178, %v1910
        %vm2005 = vcmp.eq.s32.totalorder %v179, %v1910
        %vm2006 = vcmp.eq.s32.totalorder %v178, %v1913
        %vm2007 = vcmp.eq.s32.totalorder %v179, %v1913
        %vm2008 = vcmp.eq.s32.totalorder %v178, %v1916
        %vm2009 = vcmp.eq.s32.totalorder %v179, %v1916
        %vm2010 = vcmp.eq.s32.totalorder %v178, %v1919
        %vm2011 = vcmp.eq.s32.totalorder %v179, %v1919
        %vm2012 = vcmp.eq.s32.totalorder %v178, %v1922
        %vm2013 = vcmp.eq.s32.totalorder %v179, %v1922
        %vm2014 = vcmp.eq.s32.totalorder %v178, %v1925
        %vm2015 = vcmp.eq.s32.totalorder %v179, %v1925
        %vm2016 = vcmp.eq.s32.totalorder %v178, %v1928
        %vm2017 = vcmp.eq.s32.totalorder %v179, %v1928
        %vm2018 = vcmp.eq.s32.totalorder %v178, %v1931
        %vm2019 = vcmp.eq.s32.totalorder %v179, %v1931
        %vm2020 = vcmp.eq.s32.totalorder %v178, %v1934
        %vm2021 = vcmp.eq.s32.totalorder %v179, %v1934
        %vm2022 = vcmp.eq.s32.totalorder %v178, %v1937
        %vm2023 = vcmp.eq.s32.totalorder %v179, %v1937
        %vm2024 = vcmp.eq.s32.totalorder %v178, %v1940
        %vm2025 = vcmp.eq.s32.totalorder %v179, %v1940
        %vm2026 = vcmp.eq.s32.totalorder %v178, %v1943
        %vm2027 = vcmp.eq.s32.totalorder %v179, %v1943
        %vm2028 = vcmp.eq.s32.totalorder %v178, %v1946
        %vm2029 = vcmp.eq.s32.totalorder %v179, %v1946
        %vm2030 = vcmp.eq.s32.totalorder %v178, %v1949
        %vm2031 = vcmp.eq.s32.totalorder %v179, %v1949
        %vm2032 = vcmp.eq.s32.totalorder %v178, %v1952
        %vm2033 = vcmp.eq.s32.totalorder %v179, %v1952
        %vm2034 = vcmp.eq.s32.totalorder %v178, %v1955
        %vm2035 = vcmp.eq.s32.totalorder %v179, %v1955
        %vm2036 = vcmp.eq.s32.totalorder %v178, %v1958
        %vm2037 = vcmp.eq.s32.totalorder %v179, %v1958
        %vm2038 = vcmp.eq.s32.totalorder %v178, %v1961
        %vm2039 = vcmp.eq.s32.totalorder %v179, %v1961
        %vm2040 = vcmp.eq.s32.totalorder %v178, %v1964
        %vm2041 = vcmp.eq.s32.totalorder %v179, %v1964
        %vm2042 = vcmp.eq.s32.totalorder %v178, %v1967
        %vm2043 = vcmp.eq.s32.totalorder %v179, %v1967
        %vm2044 = vcmp.eq.s32.totalorder %v178, %v1970
        %vm2045 = vcmp.eq.s32.totalorder %v179, %v1970
        %vm2046 = vcmp.eq.s32.totalorder %v178, %v1973
        %vm2047 = vcmp.eq.s32.totalorder %v179, %v1973
        %vm2048 = vcmp.eq.s32.totalorder %v178, %v1976
        %vm2049 = vcmp.eq.s32.totalorder %v179, %v1976
        %vm2050 = vcmp.eq.s32.totalorder %v178, %v1979
        %vm2051 = vcmp.eq.s32.totalorder %v179, %v1979
        %vm2052 = vcmp.eq.s32.totalorder %v178, %v1982
        %vm2053 = vcmp.eq.s32.totalorder %v179, %v1982
        %vm2054 = vcmp.eq.s32.totalorder %v178, %v1985
        %vm2055 = vcmp.eq.s32.totalorder %v179, %v1985
        %vm2056 = vcmp.eq.s32.totalorder %v178, %v1988
        %vm2057 = vcmp.eq.s32.totalorder %v179, %v1988
        %vm2058 = vcmp.eq.s32.totalorder %v178, %v1991
        %vm2059 = vcmp.eq.s32.totalorder %v179, %v1991
        %vm2060 = vcmp.eq.s32.totalorder %v178, %v1994
        %vm2061 = vcmp.eq.s32.totalorder %v179, %v1994
        %vm2062 = vcmp.eq.s32.totalorder %v178, %v1997
        %vm2063 = vcmp.eq.s32.totalorder %v179, %v1997
        %vm2064 = vcmp.eq.s32.totalorder %v178, %v2000
        %vm2065 = vcmp.eq.s32.totalorder %v179, %v2000
        %vm2066 = vcmp.eq.s32.totalorder %v178, %v2003
        %vm2067 = vcmp.eq.s32.totalorder %v179, %v2003
        %vm2068 = vmor %vm1844, %vm2004
        %vm2069 = vmor %vm1845, %vm2005
        %vm2070 = vmor %vm1846, %vm2006
        %vm2071 = vmor %vm1847, %vm2007
        %vm2072 = vmor %vm1848, %vm2008
        %vm2073 = vmor %vm1849, %vm2009
        %vm2074 = vmor %vm1850, %vm2010
        %vm2075 = vmor %vm1851, %vm2011
        %vm2076 = vmor %vm1852, %vm2012
        %vm2077 = vmor %vm1853, %vm2013
        %vm2078 = vmor %vm1854, %vm2014
        %vm2079 = vmor %vm1855, %vm2015
        %vm2080 = vmor %vm1856, %vm2016
        %vm2081 = vmor %vm1857, %vm2017
        %vm2082 = vmor %vm1858, %vm2018
        %vm2083 = vmor %vm1859, %vm2019
        %vm2084 = vmor %vm1860, %vm2020
        %vm2085 = vmor %vm1861, %vm2021
        %vm2086 = vmor %vm1862, %vm2022
        %vm2087 = vmor %vm1863, %vm2023
        %vm2088 = vmor %vm1864, %vm2024
        %vm2089 = vmor %vm1865, %vm2025
        %vm2090 = vmor %vm1866, %vm2026
        %vm2091 = vmor %vm1867, %vm2027
        %vm2092 = vmor %vm1868, %vm2028
        %vm2093 = vmor %vm1869, %vm2029
        %vm2094 = vmor %vm1870, %vm2030
        %vm2095 = vmor %vm1871, %vm2031
        %vm2096 = vmor %vm1872, %vm2032
        %vm2097 = vmor %vm1873, %vm2033
        %vm2098 = vmor %vm1874, %vm2034
        %vm2099 = vmor %vm1875, %vm2035
        %vm2100 = vmor %vm1876, %vm2036
        %vm2101 = vmor %vm1877, %vm2037
        %vm2102 = vmor %vm1878, %vm2038
        %vm2103 = vmor %vm1879, %vm2039
        %vm2104 = vmor %vm1880, %vm2040
        %vm2105 = vmor %vm1881, %vm2041
        %vm2106 = vmor %vm1882, %vm2042
        %vm2107 = vmor %vm1883, %vm2043
        %vm2108 = vmor %vm1884, %vm2044
        %vm2109 = vmor %vm1885, %vm2045
        %vm2110 = vmor %vm1886, %vm2046
        %vm2111 = vmor %vm1887, %vm2047
        %vm2112 = vmor %vm1888, %vm2048
        %vm2113 = vmor %vm1889, %vm2049
        %vm2114 = vmor %vm1890, %vm2050
        %vm2115 = vmor %vm1891, %vm2051
        %vm2116 = vmor %vm1892, %vm2052
        %vm2117 = vmor %vm1893, %vm2053
        %vm2118 = vmor %vm1894, %vm2054
        %vm2119 = vmor %vm1895, %vm2055
        %vm2120 = vmor %vm1896, %vm2056
        %vm2121 = vmor %vm1897, %vm2057
        %vm2122 = vmor %vm1898, %vm2058
        %vm2123 = vmor %vm1899, %vm2059
        %vm2124 = vmor %vm1900, %vm2060
        %vm2125 = vmor %vm1901, %vm2061
        %vm2126 = vmor %vm1902, %vm2062
        %vm2127 = vmor %vm1903, %vm2063
        %vm2128 = vmor %vm1904, %vm2064
        %vm2129 = vmor %vm1905, %vm2065
        %vm2130 = vmor %vm1906, %vm2066
        %vm2131 = vmor %vm1907, %vm2067
        %v2132 = vsel %vm2068, 1, 0
        %v2133 = vsel %vm2069, 1, 0
        %v2134 = vsel %vm2070, 1, 0
        %v2135 = vsel %vm2071, 1, 0
        %v2136 = vsel %vm2072, 1, 0
        %v2137 = vsel %vm2073, 1, 0
        %v2138 = vsel %vm2074, 1, 0
        %v2139 = vsel %vm2075, 1, 0
        %v2140 = vsel %vm2076, 1, 0
        %v2141 = vsel %vm2077, 1, 0
        %v2142 = vsel %vm2078, 1, 0
        %v2143 = vsel %vm2079, 1, 0
        %v2144 = vsel %vm2080, 1, 0
        %v2145 = vsel %vm2081, 1, 0
        %v2146 = vsel %vm2082, 1, 0
        %v2147 = vsel %vm2083, 1, 0
        %v2148 = vsel %vm2084, 1, 0
        %v2149 = vsel %vm2085, 1, 0
        %v2150 = vsel %vm2086, 1, 0
        %v2151 = vsel %vm2087, 1, 0
        %v2152 = vsel %vm2088, 1, 0
        %v2153 = vsel %vm2089, 1, 0
        %v2154 = vsel %vm2090, 1, 0
        %v2155 = vsel %vm2091, 1, 0
        %v2156 = vsel %vm2092, 1, 0
        %v2157 = vsel %vm2093, 1, 0
        %v2158 = vsel %vm2094, 1, 0
        %v2159 = vsel %vm2095, 1, 0
        %v2160 = vsel %vm2096, 1, 0
        %v2161 = vsel %vm2097, 1, 0
        %v2162 = vsel %vm2098, 1, 0
        %v2163 = vsel %vm2099, 1, 0
        %v2164 = vsel %vm2100, 1, 0
        %v2165 = vsel %vm2101, 1, 0
        %v2166 = vsel %vm2102, 1, 0
        %v2167 = vsel %vm2103, 1, 0
        %v2168 = vsel %vm2104, 1, 0
        %v2169 = vsel %vm2105, 1, 0
        %v2170 = vsel %vm2106, 1, 0
        %v2171 = vsel %vm2107, 1, 0
        %v2172 = vsel %vm2108, 1, 0
        %v2173 = vsel %vm2109, 1, 0
        %v2174 = vsel %vm2110, 1, 0
        %v2175 = vsel %vm2111, 1, 0
        %v2176 = vsel %vm2112, 1, 0
        %v2177 = vsel %vm2113, 1, 0
        %v2178 = vsel %vm2114, 1, 0
        %v2179 = vsel %vm2115, 1, 0
        %v2180 = vsel %vm2116, 1, 0
        %v2181 = vsel %vm2117, 1, 0
        %v2182 = vsel %vm2118, 1, 0
        %v2183 = vsel %vm2119, 1, 0
        %v2184 = vsel %vm2120, 1, 0
        %v2185 = vsel %vm2121, 1, 0
        %v2186 = vsel %vm2122, 1, 0
        %v2187 = vsel %vm2123, 1, 0
        %v2188 = vsel %vm2124, 1, 0
        %v2189 = vsel %vm2125, 1, 0
        %v2190 = vsel %vm2126, 1, 0
        %v2191 = vsel %vm2127, 1, 0
        %v2192 = vsel %vm2128, 1, 0
        %v2193 = vsel %vm2129, 1, 0
        %v2194 = vsel %vm2130, 1, 0
        %v2195 = vsel %vm2131, 1, 0
        %v2196 = vcvt.s32.f32 %v2132
        %v2197 = vcvt.s32.f32 %v2133
        %v2198 = vcvt.s32.f32 %v2134
        %v2199 = vcvt.s32.f32 %v2135
        %v2200 = vcvt.s32.f32 %v2136
        %v2201 = vcvt.s32.f32 %v2137
        %v2202 = vcvt.s32.f32 %v2138
        %v2203 = vcvt.s32.f32 %v2139
        %v2204 = vcvt.s32.f32 %v2140
        %v2205 = vcvt.s32.f32 %v2141
        %v2206 = vcvt.s32.f32 %v2142
        %v2207 = vcvt.s32.f32 %v2143
        %v2208 = vcvt.s32.f32 %v2144
        %v2209 = vcvt.s32.f32 %v2145
        %v2210 = vcvt.s32.f32 %v2146
        %v2211 = vcvt.s32.f32 %v2147
        %v2212 = vcvt.s32.f32 %v2148
        %v2213 = vcvt.s32.f32 %v2149
        %v2214 = vcvt.s32.f32 %v2150
        %v2215 = vcvt.s32.f32 %v2151
        %v2216 = vcvt.s32.f32 %v2152
        %v2217 = vcvt.s32.f32 %v2153
        %v2218 = vcvt.s32.f32 %v2154
        %v2219 = vcvt.s32.f32 %v2155
        %v2220 = vcvt.s32.f32 %v2156
        %v2221 = vcvt.s32.f32 %v2157
        %v2222 = vcvt.s32.f32 %v2158
        %v2223 = vcvt.s32.f32 %v2159
        %v2224 = vcvt.s32.f32 %v2160
        %v2225 = vcvt.s32.f32 %v2161
        %v2226 = vcvt.s32.f32 %v2162
        %v2227 = vcvt.s32.f32 %v2163
        %v2228 = vcvt.s32.f32 %v2164
        %v2229 = vcvt.s32.f32 %v2165
        %v2230 = vcvt.s32.f32 %v2166
        %v2231 = vcvt.s32.f32 %v2167
        %v2232 = vcvt.s32.f32 %v2168
        %v2233 = vcvt.s32.f32 %v2169
        %v2234 = vcvt.s32.f32 %v2170
        %v2235 = vcvt.s32.f32 %v2171
        %v2236 = vcvt.s32.f32 %v2172
        %v2237 = vcvt.s32.f32 %v2173
        %v2238 = vcvt.s32.f32 %v2174
        %v2239 = vcvt.s32.f32 %v2175
        %v2240 = vcvt.s32.f32 %v2176
        %v2241 = vcvt.s32.f32 %v2177
        %v2242 = vcvt.s32.f32 %v2178
        %v2243 = vcvt.s32.f32 %v2179
        %v2244 = vcvt.s32.f32 %v2180
        %v2245 = vcvt.s32.f32 %v2181
        %v2246 = vcvt.s32.f32 %v2182
        %v2247 = vcvt.s32.f32 %v2183
        %v2248 = vcvt.s32.f32 %v2184
        %v2249 = vcvt.s32.f32 %v2185
        %v2250 = vcvt.s32.f32 %v2186
        %v2251 = vcvt.s32.f32 %v2187
        %v2252 = vcvt.s32.f32 %v2188
        %v2253 = vcvt.s32.f32 %v2189
        %v2254 = vcvt.s32.f32 %v2190
        %v2255 = vcvt.s32.f32 %v2191
        %v2256 = vcvt.s32.f32 %v2192
        %v2257 = vcvt.s32.f32 %v2193
        %v2258 = vcvt.s32.f32 %v2194
        %v2259 = vcvt.s32.f32 %v2195
        %v2260 = vld [vmem:[%s1] sm:$0xff]
        %v2261 = vld [vmem:[%s1 + $0x8] sm:$0xff]
        %v2262 = vld [vmem:[%s1 + $0x10] sm:$0xff]
        %v2263 = vld [vmem:[%s1 + $0x18] sm:$0xff]
        %v2264 = vld [vmem:[%s1 + $0x20] sm:$0xff]
        %v2265 = vld [vmem:[%s1 + $0x28] sm:$0xff]
        %v2266 = vld [vmem:[%s1 + $0x30] sm:$0xff]
        %v2267 = vld [vmem:[%s1 + $0x38] sm:$0xff]
        %v2268 = vld [vmem:[%s1 + $0x40] sm:$0xff]
        %v2269 = vld [vmem:[%s1 + $0x48] sm:$0xff]
        %v2270 = vld [vmem:[%s1 + $0x50] sm:$0xff]
        %v2271 = vld [vmem:[%s1 + $0x58] sm:$0xff]
        %v2272 = vld [vmem:[%s1 + $0x60] sm:$0xff]
        %v2273 = vld [vmem:[%s1 + $0x68] sm:$0xff]
        %v2274 = vld [vmem:[%s1 + $0x70] sm:$0xff]
        %v2275 = vld [vmem:[%s1 + $0x78] sm:$0xff]
        %v2276 = vld [vmem:[%s1 + $0x80] sm:$0xff]
        %v2277 = vld [vmem:[%s1 + $0x88] sm:$0xff]
        %v2278 = vld [vmem:[%s1 + $0x90] sm:$0xff]
        %v2279 = vld [vmem:[%s1 + $0x98] sm:$0xff]
        %v2280 = vld [vmem:[%s1 + $0xa0] sm:$0xff]
        %v2281 = vld [vmem:[%s1 + $0xa8] sm:$0xff]
        %v2282 = vld [vmem:[%s1 + $0xb0] sm:$0xff]
        %v2283 = vld [vmem:[%s1 + $0xb8] sm:$0xff]
        %v2284 = vld [vmem:[%s1 + $0xc0] sm:$0xff]
        %v2285 = vld [vmem:[%s1 + $0xc8] sm:$0xff]
        %v2286 = vld [vmem:[%s1 + $0xd0] sm:$0xff]
        %v2287 = vld [vmem:[%s1 + $0xd8] sm:$0xff]
        %v2288 = vld [vmem:[%s1 + $0xe0] sm:$0xff]
        %v2289 = vld [vmem:[%s1 + $0xe8] sm:$0xff]
        %v2290 = vld [vmem:[%s1 + $0xf0] sm:$0xff]
        %v2291 = vld [vmem:[%s1 + $0xf8] sm:$0xff]
        %2292 = vmatpush.msra.mxu0 %v2275
        %2293 = vmatpush.msra.mxu0 %v2274
        %2294 = vmatpush.msra.mxu0 %v2273
        %2295 = vmatpush.msra.mxu0 %v2272
        %2296 = vmatpush.msra.mxu0 %v2271
        %2297 = vmatpush.msra.mxu0 %v2270
        %2298 = vmatpush.msra.mxu0 %v2269
        %2299 = vmatpush.msra.mxu0 %v2268
        %2300 = vmatpush.msra.mxu0 %v2267
        %2301 = vmatpush.msra.mxu0 %v2266
        %2302 = vmatpush.msra.mxu0 %v2265
        %2303 = vmatpush.msra.mxu0 %v2264
        %2304 = vmatpush.msra.mxu0 %v2263
        %2305 = vmatpush.msra.mxu0 %v2262
        %2306 = vmatpush.msra.mxu0 %v2261
        %2307 = vmatpush.msra.mxu0 %v2260
        %2308 = vmatmul.f32.gmra.mxu0 %v2196
        %v2309 = vpop.f32.mrf.mxu0
        %v2310 = vadd.f32 0.0, %v2309
        %2311 = vmatmul.f32.gmra.mxu0 %v2198
        %v2312 = vpop.f32.mrf.mxu0
        %v2313 = vadd.f32 0.0, %v2312
        %2314 = vmatmul.f32.gmra.mxu0 %v2200
        %v2315 = vpop.f32.mrf.mxu0
        %v2316 = vadd.f32 0.0, %v2315
        %2317 = vmatmul.f32.gmra.mxu0 %v2202
        %v2318 = vpop.f32.mrf.mxu0
        %v2319 = vadd.f32 0.0, %v2318
        %2320 = vmatmul.f32.gmra.mxu0 %v2204
        %v2321 = vpop.f32.mrf.mxu0
        %v2322 = vadd.f32 0.0, %v2321
        %2323 = vmatmul.f32.gmra.mxu0 %v2206
        %v2324 = vpop.f32.mrf.mxu0
        %v2325 = vadd.f32 0.0, %v2324
        %2326 = vmatmul.f32.gmra.mxu0 %v2208
        %v2327 = vpop.f32.mrf.mxu0
        %v2328 = vadd.f32 0.0, %v2327
        %2329 = vmatmul.f32.gmra.mxu0 %v2210
        %v2330 = vpop.f32.mrf.mxu0
        %v2331 = vadd.f32 0.0, %v2330
        %2332 = vmatmul.f32.gmra.mxu0 %v2212
        %v2333 = vpop.f32.mrf.mxu0
        %v2334 = vadd.f32 0.0, %v2333
        %2335 = vmatmul.f32.gmra.mxu0 %v2214
        %v2336 = vpop.f32.mrf.mxu0
        %v2337 = vadd.f32 0.0, %v2336
        %2338 = vmatmul.f32.gmra.mxu0 %v2216
        %v2339 = vpop.f32.mrf.mxu0
        %v2340 = vadd.f32 0.0, %v2339
        %2341 = vmatmul.f32.gmra.mxu0 %v2218
        %v2342 = vpop.f32.mrf.mxu0
        %v2343 = vadd.f32 0.0, %v2342
        %2344 = vmatmul.f32.gmra.mxu0 %v2220
        %v2345 = vpop.f32.mrf.mxu0
        %v2346 = vadd.f32 0.0, %v2345
        %2347 = vmatmul.f32.gmra.mxu0 %v2222
        %v2348 = vpop.f32.mrf.mxu0
        %v2349 = vadd.f32 0.0, %v2348
        %2350 = vmatmul.f32.gmra.mxu0 %v2224
        %v2351 = vpop.f32.mrf.mxu0
        %v2352 = vadd.f32 0.0, %v2351
        %2353 = vmatmul.f32.gmra.mxu0 %v2226
        %v2354 = vpop.f32.mrf.mxu0
        %v2355 = vadd.f32 0.0, %v2354
        %2356 = vmatmul.f32.gmra.mxu0 %v2228
        %v2357 = vpop.f32.mrf.mxu0
        %v2358 = vadd.f32 0.0, %v2357
        %2359 = vmatmul.f32.gmra.mxu0 %v2230
        %v2360 = vpop.f32.mrf.mxu0
        %v2361 = vadd.f32 0.0, %v2360
        %2362 = vmatmul.f32.gmra.mxu0 %v2232
        %v2363 = vpop.f32.mrf.mxu0
        %v2364 = vadd.f32 0.0, %v2363
        %2365 = vmatmul.f32.gmra.mxu0 %v2234
        %v2366 = vpop.f32.mrf.mxu0
        %v2367 = vadd.f32 0.0, %v2366
        %2368 = vmatmul.f32.gmra.mxu0 %v2236
        %v2369 = vpop.f32.mrf.mxu0
        %v2370 = vadd.f32 0.0, %v2369
        %2371 = vmatmul.f32.gmra.mxu0 %v2238
        %v2372 = vpop.f32.mrf.mxu0
        %v2373 = vadd.f32 0.0, %v2372
        %2374 = vmatmul.f32.gmra.mxu0 %v2240
        %v2375 = vpop.f32.mrf.mxu0
        %v2376 = vadd.f32 0.0, %v2375
        %2377 = vmatmul.f32.gmra.mxu0 %v2242
        %v2378 = vpop.f32.mrf.mxu0
        %v2379 = vadd.f32 0.0, %v2378
        %2380 = vmatmul.f32.gmra.mxu0 %v2244
        %v2381 = vpop.f32.mrf.mxu0
        %v2382 = vadd.f32 0.0, %v2381
        %2383 = vmatmul.f32.gmra.mxu0 %v2246
        %v2384 = vpop.f32.mrf.mxu0
        %v2385 = vadd.f32 0.0, %v2384
        %2386 = vmatmul.f32.gmra.mxu0 %v2248
        %v2387 = vpop.f32.mrf.mxu0
        %v2388 = vadd.f32 0.0, %v2387
        %2389 = vmatmul.f32.gmra.mxu0 %v2250
        %v2390 = vpop.f32.mrf.mxu0
        %v2391 = vadd.f32 0.0, %v2390
        %2392 = vmatmul.f32.gmra.mxu0 %v2252
        %v2393 = vpop.f32.mrf.mxu0
        %v2394 = vadd.f32 0.0, %v2393
        %2395 = vmatmul.f32.gmra.mxu0 %v2254
        %v2396 = vpop.f32.mrf.mxu0
        %v2397 = vadd.f32 0.0, %v2396
        %2398 = vmatmul.f32.gmra.mxu0 %v2256
        %v2399 = vpop.f32.mrf.mxu0
        %v2400 = vadd.f32 0.0, %v2399
        %2401 = vmatmul.f32.gmra.mxu0 %v2258
        %v2402 = vpop.f32.mrf.mxu0
        %v2403 = vadd.f32 0.0, %v2402
        %2404 = vdwg.mxu0
        %2405 = vmatpush.msra.mxu0 %v2291
        %2406 = vmatpush.msra.mxu0 %v2290
        %2407 = vmatpush.msra.mxu0 %v2289
        %2408 = vmatpush.msra.mxu0 %v2288
        %2409 = vmatpush.msra.mxu0 %v2287
        %2410 = vmatpush.msra.mxu0 %v2286
        %2411 = vmatpush.msra.mxu0 %v2285
        %2412 = vmatpush.msra.mxu0 %v2284
        %2413 = vmatpush.msra.mxu0 %v2283
        %2414 = vmatpush.msra.mxu0 %v2282
        %2415 = vmatpush.msra.mxu0 %v2281
        %2416 = vmatpush.msra.mxu0 %v2280
        %2417 = vmatpush.msra.mxu0 %v2279
        %2418 = vmatpush.msra.mxu0 %v2278
        %2419 = vmatpush.msra.mxu0 %v2277
        %2420 = vmatpush.msra.mxu0 %v2276
        %2421 = vmatmul.f32.gmra.mxu0 %v2197
        %v2422 = vpop.f32.mrf.mxu0
        %v2423 = vadd.f32 %v2310, %v2422
        %2424 = vmatmul.f32.gmra.mxu0 %v2199
        %v2425 = vpop.f32.mrf.mxu0
        %v2426 = vadd.f32 %v2313, %v2425
        %2427 = vmatmul.f32.gmra.mxu0 %v2201
        %v2428 = vpop.f32.mrf.mxu0
        %v2429 = vadd.f32 %v2316, %v2428
        %2430 = vmatmul.f32.gmra.mxu0 %v2203
        %v2431 = vpop.f32.mrf.mxu0
        %v2432 = vadd.f32 %v2319, %v2431
        %2433 = vmatmul.f32.gmra.mxu0 %v2205
        %v2434 = vpop.f32.mrf.mxu0
        %v2435 = vadd.f32 %v2322, %v2434
        %2436 = vmatmul.f32.gmra.mxu0 %v2207
        %v2437 = vpop.f32.mrf.mxu0
        %v2438 = vadd.f32 %v2325, %v2437
        %2439 = vmatmul.f32.gmra.mxu0 %v2209
        %v2440 = vpop.f32.mrf.mxu0
        %v2441 = vadd.f32 %v2328, %v2440
        %2442 = vmatmul.f32.gmra.mxu0 %v2211
        %v2443 = vpop.f32.mrf.mxu0
        %v2444 = vadd.f32 %v2331, %v2443
        %2445 = vmatmul.f32.gmra.mxu0 %v2213
        %v2446 = vpop.f32.mrf.mxu0
        %v2447 = vadd.f32 %v2334, %v2446
        %2448 = vmatmul.f32.gmra.mxu0 %v2215
        %v2449 = vpop.f32.mrf.mxu0
        %v2450 = vadd.f32 %v2337, %v2449
        %2451 = vmatmul.f32.gmra.mxu0 %v2217
        %v2452 = vpop.f32.mrf.mxu0
        %v2453 = vadd.f32 %v2340, %v2452
        %2454 = vmatmul.f32.gmra.mxu0 %v2219
        %v2455 = vpop.f32.mrf.mxu0
        %v2456 = vadd.f32 %v2343, %v2455
        %2457 = vmatmul.f32.gmra.mxu0 %v2221
        %v2458 = vpop.f32.mrf.mxu0
        %v2459 = vadd.f32 %v2346, %v2458
        %2460 = vmatmul.f32.gmra.mxu0 %v2223
        %v2461 = vpop.f32.mrf.mxu0
        %v2462 = vadd.f32 %v2349, %v2461
        %2463 = vmatmul.f32.gmra.mxu0 %v2225
        %v2464 = vpop.f32.mrf.mxu0
        %v2465 = vadd.f32 %v2352, %v2464
        %2466 = vmatmul.f32.gmra.mxu0 %v2227
        %v2467 = vpop.f32.mrf.mxu0
        %v2468 = vadd.f32 %v2355, %v2467
        %2469 = vmatmul.f32.gmra.mxu0 %v2229
        %v2470 = vpop.f32.mrf.mxu0
        %v2471 = vadd.f32 %v2358, %v2470
        %2472 = vmatmul.f32.gmra.mxu0 %v2231
        %v2473 = vpop.f32.mrf.mxu0
        %v2474 = vadd.f32 %v2361, %v2473
        %2475 = vmatmul.f32.gmra.mxu0 %v2233
        %v2476 = vpop.f32.mrf.mxu0
        %v2477 = vadd.f32 %v2364, %v2476
        %2478 = vmatmul.f32.gmra.mxu0 %v2235
        %v2479 = vpop.f32.mrf.mxu0
        %v2480 = vadd.f32 %v2367, %v2479
        %2481 = vmatmul.f32.gmra.mxu0 %v2237
        %v2482 = vpop.f32.mrf.mxu0
        %v2483 = vadd.f32 %v2370, %v2482
        %2484 = vmatmul.f32.gmra.mxu0 %v2239
        %v2485 = vpop.f32.mrf.mxu0
        %v2486 = vadd.f32 %v2373, %v2485
        %2487 = vmatmul.f32.gmra.mxu0 %v2241
        %v2488 = vpop.f32.mrf.mxu0
        %v2489 = vadd.f32 %v2376, %v2488
        %2490 = vmatmul.f32.gmra.mxu0 %v2243
        %v2491 = vpop.f32.mrf.mxu0
        %v2492 = vadd.f32 %v2379, %v2491
        %2493 = vmatmul.f32.gmra.mxu0 %v2245
        %v2494 = vpop.f32.mrf.mxu0
        %v2495 = vadd.f32 %v2382, %v2494
        %2496 = vmatmul.f32.gmra.mxu0 %v2247
        %v2497 = vpop.f32.mrf.mxu0
        %v2498 = vadd.f32 %v2385, %v2497
        %2499 = vmatmul.f32.gmra.mxu0 %v2249
        %v2500 = vpop.f32.mrf.mxu0
        %v2501 = vadd.f32 %v2388, %v2500
        %2502 = vmatmul.f32.gmra.mxu0 %v2251
        %v2503 = vpop.f32.mrf.mxu0
        %v2504 = vadd.f32 %v2391, %v2503
        %2505 = vmatmul.f32.gmra.mxu0 %v2253
        %v2506 = vpop.f32.mrf.mxu0
        %v2507 = vadd.f32 %v2394, %v2506
        %2508 = vmatmul.f32.gmra.mxu0 %v2255
        %v2509 = vpop.f32.mrf.mxu0
        %v2510 = vadd.f32 %v2397, %v2509
        %2511 = vmatmul.f32.gmra.mxu0 %v2257
        %v2512 = vpop.f32.mrf.mxu0
        %v2513 = vadd.f32 %v2400, %v2512
        %2514 = vmatmul.f32.gmra.mxu0 %v2259
        %v2515 = vpop.f32.mrf.mxu0
        %v2516 = vadd.f32 %v2403, %v2515
        %2517 = vdwg.mxu0
        %2518 = vst [vmem:[%s137] sm:$0xff] %v2423
        %2519 = vst [vmem:[%s137 + $0x8] sm:$0xff] %v2426
        %2520 = vst [vmem:[%s137 + $0x10] sm:$0xff] %v2429
        %2521 = vst [vmem:[%s137 + $0x18] sm:$0xff] %v2432
        %2522 = vst [vmem:[%s137 + $0x20] sm:$0xff] %v2435
        %2523 = vst [vmem:[%s137 + $0x28] sm:$0xff] %v2438
        %2524 = vst [vmem:[%s137 + $0x30] sm:$0xff] %v2441
        %2525 = vst [vmem:[%s137 + $0x38] sm:$0xff] %v2444
        %2526 = vst [vmem:[%s137 + $0x40] sm:$0xff] %v2447
        %2527 = vst [vmem:[%s137 + $0x48] sm:$0xff] %v2450
        %2528 = vst [vmem:[%s137 + $0x50] sm:$0xff] %v2453
        %2529 = vst [vmem:[%s137 + $0x58] sm:$0xff] %v2456
        %2530 = vst [vmem:[%s137 + $0x60] sm:$0xff] %v2459
        %2531 = vst [vmem:[%s137 + $0x68] sm:$0xff] %v2462
        %2532 = vst [vmem:[%s137 + $0x70] sm:$0xff] %v2465
        %2533 = vst [vmem:[%s137 + $0x78] sm:$0xff] %v2468
        %2534 = vst [vmem:[%s137 + $0x80] sm:$0xff] %v2471
        %2535 = vst [vmem:[%s137 + $0x88] sm:$0xff] %v2474
        %2536 = vst [vmem:[%s137 + $0x90] sm:$0xff] %v2477
        %2537 = vst [vmem:[%s137 + $0x98] sm:$0xff] %v2480
        %2538 = vst [vmem:[%s137 + $0xa0] sm:$0xff] %v2483
        %2539 = vst [vmem:[%s137 + $0xa8] sm:$0xff] %v2486
        %2540 = vst [vmem:[%s137 + $0xb0] sm:$0xff] %v2489
        %2541 = vst [vmem:[%s137 + $0xb8] sm:$0xff] %v2492
        %2542 = vst [vmem:[%s137 + $0xc0] sm:$0xff] %v2495
        %2543 = vst [vmem:[%s137 + $0xc8] sm:$0xff] %v2498
        %2544 = vst [vmem:[%s137 + $0xd0] sm:$0xff] %v2501
        %2545 = vst [vmem:[%s137 + $0xd8] sm:$0xff] %v2504
        %2546 = vst [vmem:[%s137 + $0xe0] sm:$0xff] %v2507
        %2547 = vst [vmem:[%s137 + $0xe8] sm:$0xff] %v2510
        %2548 = vst [vmem:[%s137 + $0xf0] sm:$0xff] %v2513
        %2549 = vst [vmem:[%s137 + $0xf8] sm:$0xff] %v2516
        %s2550 = sand.u32 %s71, 1
        %s2551 = scalar_lea.sflag [#allocation3], %s2550
        %s2552 = sand.u32 %s71, 1
        %s2553 = smul.addr %s2552, 256
        %s2554 = scalar_lea.vmem [#allocation2], %s2553
        // Predicated region
        $region29: #{tpu_custom_call.1} parent=27 // pred_check
          %p2555 = pneg %p81
        $region30: #{tpu_custom_call.1} parent=27 // pred_check_branch
          %2557 = sbr.rel (%p2555) target = $region32
        $region31: #{tpu_custom_call.1} parent=27 // pred_region
          %s2558 = smul.u32 32, %s16
          %2560 = vsyncadd %s2551, 0
          %s2561 = smul.addr %s2558, 8
          %s2562 = scalar_lea.hbm %s2, %s2561
          %s2563 = sshll.u32 %s2554, 4
          %s2564 = int_to_ptr.vmem [resolvable:$true] %s2563
          %s2565 = sshll.u32 %s2562, 4
          %s2566 = int_to_ptr.hbm [resolvable:$true] %s2565
          %2571 = dma.vmem_to_hbm [thread:$0]  %s2564, 4096, %s2566, %s2551, 128, 128, 8
        $region32: #{tpu_custom_call.1} parent=27 // pred_fallthru
          _
      $region28: #{tpu_custom_call.1} parent=5 // pred_fallthru
        _
      %p2572 = scmp.le.s32.totalorder 2, %s11
      // Predicated region
      $region33: #{tpu_custom_call.1} parent=5 // pred_check
        %p2573 = pneg %p2572
      $region34: #{tpu_custom_call.1} parent=5 // pred_check_branch
        %2575 = sbr.rel (%p2573) target = $region36
      $region35: #{tpu_custom_call.1} parent=5 // pred_region
        %s2576 = ssub.s32 %s11, 2
        // Predicated region
        $region37: #{tpu_custom_call.1} parent=35 // pred_check
          %p2577 = pneg %p87
        $region38: #{tpu_custom_call.1} parent=35 // pred_check_branch
          %2579 = sbr.rel (%p2577) target = $region40
        $region39: #{tpu_custom_call.1} parent=35 // pred_region
          %s2580 = sand.u32 %s72, 1
          %s2581 = scalar_lea.sflag [#allocation3], %s2580
          %s2582 = sand.u32 %s72, 1
          %s2583 = smul.addr %s2582, 256
          %s2584 = scalar_lea.vmem [#allocation2], %s2583
          %2586 = dma.done %s2581, 4096
        $region40: #{tpu_custom_call.1} parent=35 // pred_fallthru
          _
      $region36: #{tpu_custom_call.1} parent=5 // pred_fallthru
        _
    $region6: #{tpu_custom_call.1} parent=1 // loop_footer
      %s15 = sadd.s32 1, %s11
    $region7: #{tpu_custom_call.1} parent=1 // loop_footer_branch
      %10 = sbr.rel target = $region3
    $region8: #{tpu_custom_call.1} parent=1 // loop_exit
      _
    %2587 = vsyncpa [#allocation3], 1
    %s2588 = scalar_lea.sflag [#allocation3], 1
    %2589 = vsyncpa %s2588, 1

</llo_original>
